<compile_context>
chip_gen: v5e
topology: v5e:2x2
jax: 0.10.0
libtpu: 0.0.40
codegen_flags: <defaults>
</compile_context>

<pallas_src>
import jax
import jax.numpy as jnp
import numpy as np
from jax.experimental import pallas as pl
from jax.experimental.pallas import tpu as pltpu

# ---- small demo hyperparameters (consistent with the module's __init__) ----
D_MODEL = 32
NHEAD = 4
NUM_LAYERS = 2
MAX_SEQ_LEN = 16
K_PROJ = 8
BATCH = 2
SEQ = 8                        # kv_len <= max_seq_len -> proj_k sliced to SEQ
D_HEAD = D_MODEL // NHEAD      # 8
D_FF = 4 * D_MODEL             # 128 (linformer FeedForward uses mult=4)
LN_EPS = 1e-5
BN = BATCH * SEQ               # 16 flattened residual rows
BK = BATCH * K_PROJ            # 16 flattened projected-key rows
KALL = NHEAD * BK              # 64 head-stacked key lanes

# ---- packed parameter slab layout: one (512, 128) f32 array, one DMA ----
LANES = 128
R_KMASK = 0                    # (64, 32)  kron(I_heads, ones) 0/1 key mask
R_AMASK = 64                   # (16, 64)  batch block-diagonal additive mask
R_SMAT = 80                    # (64, 64)  per-head-group sum-broadcast matrix
ROWS_CONST = 144
# per-layer block (184 rows), every item starts on an 8-row boundary:
OFF_VECS = 0    # 8 rows: ln1g, ln1b, ln2g, ln2b, bo, b2 (lanes 0:32), b1 (lanes 0:128)
OFF_WQ = 8      # (32, 32)  already scaled by 1/sqrt(d_head)
OFF_WK = 40     # (32, 8)
OFF_WO = 72     # (32, 32)
OFF_PKT = 104   # (16, 16)  block-diagonal batched key projection Pk^T
OFF_W1 = 120    # (32, 128)
OFF_W2T = 152   # (32, 128) W2 transposed (lane-dense)
ROWS_PER_LAYER = 184
R_TOTAL = ROWS_CONST + NUM_LAYERS * ROWS_PER_LAYER   # 512


def _erf(x):
    # Abramowitz & Stegun 7.1.26 (|err| < 1.5e-7).  Exact divide kept on
    # purpose: accuracy headroom matters more than the one VALU divide here.
    a1, a2, a3, a4, a5 = 0.254829592, -0.284496736, 1.421413741, -1.453152027, 1.061405429
    p = 0.3275911
    ax = jnp.abs(x)
    t = 1.0 / (1.0 + p * ax)
    poly = ((((a5 * t + a4) * t + a3) * t + a2) * t + a1) * t
    y = 1.0 - poly * jnp.exp(-ax * ax)
    return jnp.where(x >= 0, y, -y)


def _gelu_exact(x):
    # nn.GELU default ('none' approximation): 0.5*x*(1+erf(x/sqrt(2)))
    return 0.5 * x * (1.0 + _erf(x * 0.7071067811865476))


def _layernorm(x, gamma, beta):
    # parallel-moment form: E[x] and E[x^2] reductions are independent
    mu = jnp.mean(x, axis=-1, keepdims=True)
    m2 = jnp.mean(x * x, axis=-1, keepdims=True)
    var = m2 - mu * mu
    return (x - mu) * jax.lax.rsqrt(var + LN_EPS) * gamma + beta


def linformer_kernel(x_ref, p_ref, o_ref):
    """Whole forward (all layers, whole batch) in one invocation.

    x_ref / o_ref : (B*N, D) flattened residual slab.
    p_ref         : (512, 128) packed parameter/constant slab (single DMA).
    """
    x = x_ref[...]                                            # (16, 32)

    kmask = p_ref[R_KMASK:R_KMASK + KALL, 0:D_MODEL]          # (64, 32)
    amask = p_ref[R_AMASK:R_AMASK + BN, 0:KALL]               # (16, 64)
    smat = p_ref[R_SMAT:R_SMAT + KALL, 0:KALL]                # (64, 64)

    for l in range(NUM_LAYERS):                               # static unroll (L=2)
        base = ROWS_CONST + l * ROWS_PER_LAYER
        v = base + OFF_VECS
        g1 = p_ref[v + 0:v + 1, 0:D_MODEL]
        be1 = p_ref[v + 1:v + 2, 0:D_MODEL]
        g2 = p_ref[v + 2:v + 3, 0:D_MODEL]
        be2 = p_ref[v + 3:v + 4, 0:D_MODEL]
        bo = p_ref[v + 4:v + 5, 0:D_MODEL]
        b2 = p_ref[v + 5:v + 6, 0:D_MODEL]
        b1 = p_ref[v + 6:v + 7, 0:D_FF]
        wq = p_ref[base + OFF_WQ:base + OFF_WQ + D_MODEL, 0:D_MODEL]
        wk = p_ref[base + OFF_WK:base + OFF_WK + D_MODEL, 0:D_HEAD]
        wo = p_ref[base + OFF_WO:base + OFF_WO + D_MODEL, 0:D_MODEL]
        pkT = p_ref[base + OFF_PKT:base + OFF_PKT + BK, 0:BN]
        w1 = p_ref[base + OFF_W1:base + OFF_W1 + D_MODEL, 0:D_FF]
        w2t = p_ref[base + OFF_W2T:base + OFF_W2T + D_MODEL, 0:D_FF]

        # ---- PreNorm + LinformerSelfAttention (share_kv: values == keys) ----
        xn = _layernorm(x, g1, be1)                                        # (16, 32)
        q = jnp.dot(xn, wq, preferred_element_type=jnp.float32)            # (16, 32)
        kv = jnp.dot(xn, wk, preferred_element_type=jnp.float32)           # (16, 8)
        kp = jnp.dot(pkT, kv, preferred_element_type=jnp.float32)          # (16, 8)

        # Block-diagonal (heads x shared-kv) key matrix: kron(I_heads, kp).
        krow = jnp.concatenate([kp] * NHEAD, axis=1)                       # (16, 32)
        kbig = jnp.concatenate([krow] * NHEAD, axis=0) * kmask             # (64, 32)

        # All heads fused: dots (16, 64) = q @ kbig^T, + batch block mask.
        dots = jax.lax.dot_general(q, kbig, (((1,), (1,)), ((), ())),
                                   preferred_element_type=jnp.float32) + amask
        e = jnp.exp(dots)                      # masked lanes underflow to exactly 0
        den = jnp.dot(e, smat, preferred_element_type=jnp.float32)         # group sums
        attn = e / den                                                      # exact softmax
        ctx = jnp.dot(attn, kbig, preferred_element_type=jnp.float32)      # (16, 32)
        x = x + jnp.dot(ctx, wo, preferred_element_type=jnp.float32) + bo

        # ---- PreNorm + FeedForward (GELU, mult=4); dropout = identity ----
        xn2 = _layernorm(x, g2, be2)
        h = _gelu_exact(jnp.dot(xn2, w1, preferred_element_type=jnp.float32) + b1)
        x = x + jax.lax.dot_general(h, w2t, (((1,), (1,)), ((), ())),
                                    preferred_element_type=jnp.float32) + b2

    o_ref[...] = x


def efficient_transformer(x, slab):
    B, N, D = x.shape
    x2d = x.reshape(B * N, D)                                  # flatten batch*seq
    vmem = pl.BlockSpec(memory_space=pltpu.MemorySpace.VMEM)   # whole array, resident
    out2d = pl.pallas_call(
        linformer_kernel,
        out_shape=jax.ShapeDtypeStruct((B * N, D), jnp.float32),
        in_specs=[vmem, vmem],
        out_specs=vmem,
    )(x2d, slab)
    return out2d.reshape(B, N, D)


def init_params(key):
    ks = jax.random.split(key, 7)

    def nrm(k, shape, fan_in):
        return jax.random.normal(k, shape, jnp.float32) / np.sqrt(fan_in)

    L = NUM_LAYERS
    ln1g = jnp.ones((L, 1, D_MODEL), jnp.float32)
    ln1b = jnp.zeros((L, 1, D_MODEL), jnp.float32)
    ln2g = jnp.ones((L, 1, D_MODEL), jnp.float32)
    ln2b = jnp.zeros((L, 1, D_MODEL), jnp.float32)

    wq = nrm(ks[0], (L, D_MODEL, D_MODEL), D_MODEL)
    wk = nrm(ks[1], (L, D_MODEL, D_HEAD), D_MODEL)          # one_kv_head
    proj_k = nrm(ks[2], (L, MAX_SEQ_LEN, K_PROJ), MAX_SEQ_LEN)
    wo = nrm(ks[3], (L, D_MODEL, D_MODEL), D_MODEL)
    bo = jnp.zeros((L, 1, D_MODEL), jnp.float32)
    w1 = nrm(ks[4], (L, D_MODEL, D_FF), D_MODEL)
    b1 = 0.01 * jax.random.normal(ks[5], (L, 1, D_FF), jnp.float32)
    w2 = nrm(ks[6], (L, D_FF, D_MODEL), D_FF)
    b2 = jnp.zeros((L, 1, D_MODEL), jnp.float32)

    # slice projection to actual kv_len and pre-transpose to (k, N)
    pkT = jnp.transpose(proj_k[:, :SEQ, :], (0, 2, 1))       # (L, K, N)
    return (ln1g, ln1b, wq, wk, pkT, wo, bo, ln2g, ln2b, w1, b1, w2, b2)


def pack_params(params):
    """Host-side packing of all params + masks into one lane-dense slab."""
    (ln1g, ln1b, wq, wk, pkT, wo, bo, ln2g, ln2b, w1, b1, w2, b2) = [
        np.asarray(p) for p in params]
    slab = np.zeros((R_TOTAL, LANES), np.float32)

    # head block-diagonal key mask (64, 32): kron(I_heads, ones(BK, D_HEAD))
    kmask = np.zeros((KALL, D_MODEL), np.float32)
    for h in range(NHEAD):
        kmask[h * BK:(h + 1) * BK, h * D_HEAD:(h + 1) * D_HEAD] = 1.0
    slab[R_KMASK:R_KMASK + KALL, 0:D_MODEL] = kmask

    # batch block-diagonal additive attention mask (16, 64)
    amask = np.full((BN, KALL), -1e30, np.float32)
    for b in range(BATCH):
        for h in range(NHEAD):
            amask[b * SEQ:(b + 1) * SEQ,
                  h * BK + b * K_PROJ:h * BK + (b + 1) * K_PROJ] = 0.0
    slab[R_AMASK:R_AMASK + BN, 0:KALL] = amask

    # per-head-group sum-broadcast matrix (64, 64): kron(I_heads, ones(BK, BK))
    smat = np.zeros((KALL, KALL), np.float32)
    for h in range(NHEAD):
        smat[h * BK:(h + 1) * BK, h * BK:(h + 1) * BK] = 1.0
    slab[R_SMAT:R_SMAT + KALL, 0:KALL] = smat

    scale = D_HEAD ** -0.5
    eye_b = np.eye(BATCH, dtype=np.float32)
    for l in range(NUM_LAYERS):
        base = ROWS_CONST + l * ROWS_PER_LAYER
        v = base + OFF_VECS
        slab[v + 0, 0:D_MODEL] = ln1g[l, 0]
        slab[v + 1, 0:D_MODEL] = ln1b[l, 0]
        slab[v + 2, 0:D_MODEL] = ln2g[l, 0]
        slab[v + 3, 0:D_MODEL] = ln2b[l, 0]
        slab[v + 4, 0:D_MODEL] = bo[l, 0]
        slab[v + 5, 0:D_MODEL] = b2[l, 0]
        slab[v + 6, 0:D_FF] = b1[l, 0]
        slab[base + OFF_WQ:base + OFF_WQ + D_MODEL, 0:D_MODEL] = wq[l] * scale
        slab[base + OFF_WK:base + OFF_WK + D_MODEL, 0:D_HEAD] = wk[l]
        slab[base + OFF_WO:base + OFF_WO + D_MODEL, 0:D_MODEL] = wo[l]
        # batched (block-diagonal across batch) key projection: (B*K, B*N)
        pkT_bd = np.einsum('bc,kn->bkcn', eye_b, pkT[l]).reshape(BK, BN)
        slab[base + OFF_PKT:base + OFF_PKT + BK, 0:BN] = pkT_bd
        slab[base + OFF_W1:base + OFF_W1 + D_MODEL, 0:D_FF] = w1[l]
        slab[base + OFF_W2T:base + OFF_W2T + D_MODEL, 0:D_FF] = w2[l].T
    return jnp.asarray(slab)


def reference(x, params):
    """Pure-JAX reference mirroring the PyTorch Linformer forward."""
    (ln1g, ln1b, wq, wk, pkT, wo, bo, ln2g, ln2b, w1, b1, w2, b2) = params

    def ln(y, g, b):
        mu = y.mean(-1, keepdims=True)
        var = ((y - mu) ** 2).mean(-1, keepdims=True)
        return (y - mu) / jnp.sqrt(var + LN_EPS) * g + b

    B, N, D = x.shape
    for l in range(NUM_LAYERS):
        xn = ln(x, ln1g[l, 0], ln1b[l, 0])
        q = xn @ wq[l]
        kv = xn @ wk[l]
        kp = jnp.einsum('kn,bnd->bkd', pkT[l], kv)
        qh = q.reshape(B, N, NHEAD, D_HEAD).transpose(0, 2, 1, 3)
        dots = jnp.einsum('bhnd,bkd->bhnk', qh, kp) * (D_HEAD ** -0.5)
        attn = jax.nn.softmax(dots, axis=-1)
        o = jnp.einsum('bhnk,bkd->bhnd', attn, kp)
        o = o.transpose(0, 2, 1, 3).reshape(B, N, D)
        x = x + o @ wo[l] + bo[l, 0]
        xn2 = ln(x, ln2g[l, 0], ln2b[l, 0])
        h = jax.nn.gelu(xn2 @ w1[l] + b1[l, 0], approximate=False)
        x = x + h @ w2[l] + b2[l, 0]
    return x


if __name__ == "__main__":
    key = jax.random.PRNGKey(0)
    kx, kparam = jax.random.split(key)
    x = jax.random.normal(kx, (BATCH, SEQ, D_MODEL), jnp.float32)
    params = init_params(kparam)
    slab = pack_params(params)

    out = jax.jit(efficient_transformer)(x, slab)
    out = jax.block_until_ready(out)

    ref = reference(x, params)
    assert out.shape == (BATCH, SEQ, D_MODEL)
    np.testing.assert_allclose(np.asarray(out), np.asarray(ref), rtol=1e-3, atol=1e-3)

    print("KERNEL_OK")
</pallas_src>

<mosaic_0001>
module attributes {stable_mosaic.version = 11 : i64} {
  func.func @linformer_kernel(%arg0: memref<16x32xf32, #tpu.memory_space<vmem>>, %arg1: memref<512x128xf32, #tpu.memory_space<vmem>>, %arg2: memref<16x32xf32, #tpu.memory_space<vmem>>) attributes {dimension_semantics = [], scalar_prefetch = 0 : i64, scratch_operands = 0 : i64, tpu.core_type = #tpu.core_type<tc>} {
    %c0 = arith.constant 0 : index
    %c0_0 = arith.constant 0 : index
    %0 = vector.load %arg0[%c0, %c0_0] : memref<16x32xf32, #tpu.memory_space<vmem>>, vector<16x32xf32>
    %c0_1 = arith.constant 0 : index
    %c0_2 = arith.constant 0 : index
    %1 = vector.load %arg1[%c0_1, %c0_2] : memref<512x128xf32, #tpu.memory_space<vmem>>, vector<64x32xf32>
    %c64 = arith.constant 64 : index
    %c0_3 = arith.constant 0 : index
    %2 = vector.load %arg1[%c64, %c0_3] : memref<512x128xf32, #tpu.memory_space<vmem>>, vector<16x64xf32>
    %c80 = arith.constant 80 : index
    %c0_4 = arith.constant 0 : index
    %3 = vector.load %arg1[%c80, %c0_4] : memref<512x128xf32, #tpu.memory_space<vmem>>, vector<64x64xf32>
    %c144 = arith.constant 144 : index
    %c0_5 = arith.constant 0 : index
    %4 = vector.load %arg1[%c144, %c0_5] : memref<512x128xf32, #tpu.memory_space<vmem>>, vector<1x32xf32>
    %c145 = arith.constant 145 : index
    %c0_6 = arith.constant 0 : index
    %5 = vector.load %arg1[%c145, %c0_6] : memref<512x128xf32, #tpu.memory_space<vmem>>, vector<1x32xf32>
    %c146 = arith.constant 146 : index
    %c0_7 = arith.constant 0 : index
    %6 = vector.load %arg1[%c146, %c0_7] : memref<512x128xf32, #tpu.memory_space<vmem>>, vector<1x32xf32>
    %c147 = arith.constant 147 : index
    %c0_8 = arith.constant 0 : index
    %7 = vector.load %arg1[%c147, %c0_8] : memref<512x128xf32, #tpu.memory_space<vmem>>, vector<1x32xf32>
    %c148 = arith.constant 148 : index
    %c0_9 = arith.constant 0 : index
    %8 = vector.load %arg1[%c148, %c0_9] : memref<512x128xf32, #tpu.memory_space<vmem>>, vector<1x32xf32>
    %c149 = arith.constant 149 : index
    %c0_10 = arith.constant 0 : index
    %9 = vector.load %arg1[%c149, %c0_10] : memref<512x128xf32, #tpu.memory_space<vmem>>, vector<1x32xf32>
    %c150 = arith.constant 150 : index
    %c0_11 = arith.constant 0 : index
    %10 = vector.load %arg1[%c150, %c0_11] : memref<512x128xf32, #tpu.memory_space<vmem>>, vector<1x128xf32>
    %c152 = arith.constant 152 : index
    %c0_12 = arith.constant 0 : index
    %11 = vector.load %arg1[%c152, %c0_12] : memref<512x128xf32, #tpu.memory_space<vmem>>, vector<32x32xf32>
    %c184 = arith.constant 184 : index
    %c0_13 = arith.constant 0 : index
    %12 = vector.load %arg1[%c184, %c0_13] : memref<512x128xf32, #tpu.memory_space<vmem>>, vector<32x8xf32>
    %c216 = arith.constant 216 : index
    %c0_14 = arith.constant 0 : index
    %13 = vector.load %arg1[%c216, %c0_14] : memref<512x128xf32, #tpu.memory_space<vmem>>, vector<32x32xf32>
    %c248 = arith.constant 248 : index
    %c0_15 = arith.constant 0 : index
    %14 = vector.load %arg1[%c248, %c0_15] : memref<512x128xf32, #tpu.memory_space<vmem>>, vector<16x16xf32>
    %c264 = arith.constant 264 : index
    %c0_16 = arith.constant 0 : index
    %15 = vector.load %arg1[%c264, %c0_16] : memref<512x128xf32, #tpu.memory_space<vmem>>, vector<32x128xf32>
    %c296 = arith.constant 296 : index
    %c0_17 = arith.constant 0 : index
    %16 = vector.load %arg1[%c296, %c0_17] : memref<512x128xf32, #tpu.memory_space<vmem>>, vector<32x128xf32>
    %cst = arith.constant dense<0.000000e+00> : vector<16xf32>
    %17 = vector.multi_reduction <add>, %0, %cst [1] : vector<16x32xf32> to vector<16xf32>
    %18 = vector.shape_cast %17 : vector<16xf32> to vector<16x1xf32>
    %cst_18 = arith.constant 3.200000e+01 : f32
    %19 = vector.broadcast %cst_18 : f32 to vector<16x1xf32>
    %20 = arith.divf %18, %19 : vector<16x1xf32>
    %21 = arith.mulf %0, %0 : vector<16x32xf32>
    %cst_19 = arith.constant dense<0.000000e+00> : vector<16xf32>
    %22 = vector.multi_reduction <add>, %21, %cst_19 [1] : vector<16x32xf32> to vector<16xf32>
    %23 = vector.shape_cast %22 : vector<16xf32> to vector<16x1xf32>
    %cst_20 = arith.constant 3.200000e+01 : f32
    %24 = vector.broadcast %cst_20 : f32 to vector<16x1xf32>
    %25 = arith.divf %23, %24 : vector<16x1xf32>
    %26 = arith.mulf %20, %20 : vector<16x1xf32>
    %27 = arith.subf %25, %26 : vector<16x1xf32>
    %28 = vector.broadcast %20 : vector<16x1xf32> to vector<16x32xf32>
    %29 = arith.subf %0, %28 : vector<16x32xf32>
    %cst_21 = arith.constant 9.99999974E-6 : f32
    %30 = vector.broadcast %cst_21 : f32 to vector<16x1xf32>
    %31 = arith.addf %27, %30 : vector<16x1xf32>
    %32 = math.rsqrt %31 : vector<16x1xf32>
    %33 = vector.broadcast %32 : vector<16x1xf32> to vector<16x32xf32>
    %34 = arith.mulf %29, %33 : vector<16x32xf32>
    %35 = vector.broadcast %4 : vector<1x32xf32> to vector<16x32xf32>
    %36 = arith.mulf %34, %35 : vector<16x32xf32>
    %37 = vector.broadcast %5 : vector<1x32xf32> to vector<16x32xf32>
    %38 = arith.addf %36, %37 : vector<16x32xf32>
    %cst_22 = arith.constant dense<0.000000e+00> : vector<16x32xf32>
    %39 = tpu.matmul %38, %11, %cst_22 {dimension_numbers = #tpu.dot_dimension_numbers<[1], [0], [0], [1], [0, 0, 1, 1], [], []>} : vector<16x32xf32>, vector<32x32xf32>, vector<16x32xf32> -> vector<16x32xf32>
    %cst_23 = arith.constant dense<0.000000e+00> : vector<16x8xf32>
    %40 = tpu.matmul %38, %12, %cst_23 {dimension_numbers = #tpu.dot_dimension_numbers<[1], [0], [0], [1], [0, 0, 1, 1], [], []>} : vector<16x32xf32>, vector<32x8xf32>, vector<16x8xf32> -> vector<16x8xf32>
    %cst_24 = arith.constant dense<0.000000e+00> : vector<16x8xf32>
    %41 = tpu.matmul %14, %40, %cst_24 {dimension_numbers = #tpu.dot_dimension_numbers<[1], [0], [0], [1], [0, 0, 1, 1], [], []>} : vector<16x16xf32>, vector<16x8xf32>, vector<16x8xf32> -> vector<16x8xf32>
    %42 = tpu.concatenate %41, %41, %41, %41 in 1 : vector<16x8xf32>, vector<16x8xf32>, vector<16x8xf32>, vector<16x8xf32> -> vector<16x32xf32>
    %43 = tpu.concatenate %42, %42, %42, %42 in 0 : vector<16x32xf32>, vector<16x32xf32>, vector<16x32xf32>, vector<16x32xf32> -> vector<64x32xf32>
    %44 = arith.mulf %43, %1 : vector<64x32xf32>
    %cst_25 = arith.constant dense<0.000000e+00> : vector<16x64xf32>
    %45 = tpu.matmul %39, %44, %cst_25 {dimension_numbers = #tpu.dot_dimension_numbers<[1], [1], [0], [0], [0, 0, 1, 0], [], []>} : vector<16x32xf32>, vector<64x32xf32>, vector<16x64xf32> -> vector<16x64xf32>
    %46 = arith.addf %45, %2 : vector<16x64xf32>
    %47 = math.exp %46 : vector<16x64xf32>
    %cst_26 = arith.constant dense<0.000000e+00> : vector<16x64xf32>
    %48 = tpu.matmul %47, %3, %cst_26 {dimension_numbers = #tpu.dot_dimension_numbers<[1], [0], [0], [1], [0, 0, 1, 1], [], []>} : vector<16x64xf32>, vector<64x64xf32>, vector<16x64xf32> -> vector<16x64xf32>
    %49 = arith.divf %47, %48 : vector<16x64xf32>
    %cst_27 = arith.constant dense<0.000000e+00> : vector<16x32xf32>
    %50 = tpu.matmul %49, %44, %cst_27 {dimension_numbers = #tpu.dot_dimension_numbers<[1], [0], [0], [1], [0, 0, 1, 1], [], []>} : vector<16x64xf32>, vector<64x32xf32>, vector<16x32xf32> -> vector<16x32xf32>
    %cst_28 = arith.constant dense<0.000000e+00> : vector<16x32xf32>
    %51 = tpu.matmul %50, %13, %cst_28 {dimension_numbers = #tpu.dot_dimension_numbers<[1], [0], [0], [1], [0, 0, 1, 1], [], []>} : vector<16x32xf32>, vector<32x32xf32>, vector<16x32xf32> -> vector<16x32xf32>
    %52 = arith.addf %0, %51 : vector<16x32xf32>
    %53 = vector.broadcast %8 : vector<1x32xf32> to vector<16x32xf32>
    %54 = arith.addf %52, %53 : vector<16x32xf32>
    %cst_29 = arith.constant dense<0.000000e+00> : vector<16xf32>
    %55 = vector.multi_reduction <add>, %54, %cst_29 [1] : vector<16x32xf32> to vector<16xf32>
    %56 = vector.shape_cast %55 : vector<16xf32> to vector<16x1xf32>
    %cst_30 = arith.constant 3.200000e+01 : f32
    %57 = vector.broadcast %cst_30 : f32 to vector<16x1xf32>
    %58 = arith.divf %56, %57 : vector<16x1xf32>
    %59 = arith.mulf %54, %54 : vector<16x32xf32>
    %cst_31 = arith.constant dense<0.000000e+00> : vector<16xf32>
    %60 = vector.multi_reduction <add>, %59, %cst_31 [1] : vector<16x32xf32> to vector<16xf32>
    %61 = vector.shape_cast %60 : vector<16xf32> to vector<16x1xf32>
    %cst_32 = arith.constant 3.200000e+01 : f32
    %62 = vector.broadcast %cst_32 : f32 to vector<16x1xf32>
    %63 = arith.divf %61, %62 : vector<16x1xf32>
    %64 = arith.mulf %58, %58 : vector<16x1xf32>
    %65 = arith.subf %63, %64 : vector<16x1xf32>
    %66 = vector.broadcast %58 : vector<16x1xf32> to vector<16x32xf32>
    %67 = arith.subf %54, %66 : vector<16x32xf32>
    %cst_33 = arith.constant 9.99999974E-6 : f32
    %68 = vector.broadcast %cst_33 : f32 to vector<16x1xf32>
    %69 = arith.addf %65, %68 : vector<16x1xf32>
    %70 = math.rsqrt %69 : vector<16x1xf32>
    %71 = vector.broadcast %70 : vector<16x1xf32> to vector<16x32xf32>
    %72 = arith.mulf %67, %71 : vector<16x32xf32>
    %73 = vector.broadcast %6 : vector<1x32xf32> to vector<16x32xf32>
    %74 = arith.mulf %72, %73 : vector<16x32xf32>
    %75 = vector.broadcast %7 : vector<1x32xf32> to vector<16x32xf32>
    %76 = arith.addf %74, %75 : vector<16x32xf32>
    %cst_34 = arith.constant dense<0.000000e+00> : vector<16x128xf32>
    %77 = tpu.matmul %76, %15, %cst_34 {dimension_numbers = #tpu.dot_dimension_numbers<[1], [0], [0], [1], [0, 0, 1, 1], [], []>} : vector<16x32xf32>, vector<32x128xf32>, vector<16x128xf32> -> vector<16x128xf32>
    %78 = vector.broadcast %10 : vector<1x128xf32> to vector<16x128xf32>
    %79 = arith.addf %77, %78 : vector<16x128xf32>
    %cst_35 = arith.constant 5.000000e-01 : f32
    %80 = vector.broadcast %cst_35 : f32 to vector<16x128xf32>
    %81 = arith.mulf %80, %79 : vector<16x128xf32>
    %cst_36 = arith.constant 0.707106769 : f32
    %82 = vector.broadcast %cst_36 : f32 to vector<16x128xf32>
    %83 = arith.mulf %79, %82 : vector<16x128xf32>
    %84 = math.absf %83 : vector<16x128xf32>
    %cst_37 = arith.constant 0.327591091 : f32
    %85 = vector.broadcast %cst_37 : f32 to vector<16x128xf32>
    %86 = arith.mulf %85, %84 : vector<16x128xf32>
    %cst_38 = arith.constant 1.000000e+00 : f32
    %87 = vector.broadcast %cst_38 : f32 to vector<16x128xf32>
    %88 = arith.addf %87, %86 : vector<16x128xf32>
    %cst_39 = arith.constant 1.000000e+00 : f32
    %89 = vector.broadcast %cst_39 : f32 to vector<16x128xf32>
    %90 = arith.divf %89, %88 : vector<16x128xf32>
    %cst_40 = arith.constant 1.06140542 : f32
    %91 = vector.broadcast %cst_40 : f32 to vector<16x128xf32>
    %92 = arith.mulf %91, %90 : vector<16x128xf32>
    %cst_41 = arith.constant -1.45315206 : f32
    %93 = vector.broadcast %cst_41 : f32 to vector<16x128xf32>
    %94 = arith.addf %92, %93 : vector<16x128xf32>
    %95 = arith.mulf %94, %90 : vector<16x128xf32>
    %cst_42 = arith.constant 1.42141378 : f32
    %96 = vector.broadcast %cst_42 : f32 to vector<16x128xf32>
    %97 = arith.addf %95, %96 : vector<16x128xf32>
    %98 = arith.mulf %97, %90 : vector<16x128xf32>
    %cst_43 = arith.constant -0.284496725 : f32
    %99 = vector.broadcast %cst_43 : f32 to vector<16x128xf32>
    %100 = arith.addf %98, %99 : vector<16x128xf32>
    %101 = arith.mulf %100, %90 : vector<16x128xf32>
    %cst_44 = arith.constant 0.254829586 : f32
    %102 = vector.broadcast %cst_44 : f32 to vector<16x128xf32>
    %103 = arith.addf %101, %102 : vector<16x128xf32>
    %104 = arith.mulf %103, %90 : vector<16x128xf32>
    %cst_45 = arith.constant 0.000000e+00 : f32
    %105 = vector.broadcast %cst_45 : f32 to vector<16x128xf32>
    %106 = arith.subf %105, %84 : vector<16x128xf32>
    %107 = arith.mulf %106, %84 : vector<16x128xf32>
    %108 = math.exp %107 : vector<16x128xf32>
    %109 = arith.mulf %104, %108 : vector<16x128xf32>
    %cst_46 = arith.constant 1.000000e+00 : f32
    %110 = vector.broadcast %cst_46 : f32 to vector<16x128xf32>
    %111 = arith.subf %110, %109 : vector<16x128xf32>
    %cst_47 = arith.constant 0.000000e+00 : f32
    %112 = vector.broadcast %cst_47 : f32 to vector<16x128xf32>
    %113 = arith.cmpf oge, %83, %112 : vector<16x128xf32>
    %cst_48 = arith.constant 0.000000e+00 : f32
    %114 = vector.broadcast %cst_48 : f32 to vector<16x128xf32>
    %115 = arith.subf %114, %111 : vector<16x128xf32>
    %116 = arith.select %113, %111, %115 : vector<16x128xi1>, vector<16x128xf32>
    %cst_49 = arith.constant 1.000000e+00 : f32
    %117 = vector.broadcast %cst_49 : f32 to vector<16x128xf32>
    %118 = arith.addf %117, %116 : vector<16x128xf32>
    %119 = arith.mulf %81, %118 : vector<16x128xf32>
    %cst_50 = arith.constant dense<0.000000e+00> : vector<16x32xf32>
    %120 = tpu.matmul %119, %16, %cst_50 {dimension_numbers = #tpu.dot_dimension_numbers<[1], [1], [0], [0], [0, 0, 1, 0], [], []>} : vector<16x128xf32>, vector<32x128xf32>, vector<16x32xf32> -> vector<16x32xf32>
    %121 = arith.addf %54, %120 : vector<16x32xf32>
    %122 = vector.broadcast %9 : vector<1x32xf32> to vector<16x32xf32>
    %123 = arith.addf %121, %122 : vector<16x32xf32>
    %c328 = arith.constant 328 : index
    %c0_51 = arith.constant 0 : index
    %124 = vector.load %arg1[%c328, %c0_51] : memref<512x128xf32, #tpu.memory_space<vmem>>, vector<1x32xf32>
    %c329 = arith.constant 329 : index
    %c0_52 = arith.constant 0 : index
    %125 = vector.load %arg1[%c329, %c0_52] : memref<512x128xf32, #tpu.memory_space<vmem>>, vector<1x32xf32>
    %c330 = arith.constant 330 : index
    %c0_53 = arith.constant 0 : index
    %126 = vector.load %arg1[%c330, %c0_53] : memref<512x128xf32, #tpu.memory_space<vmem>>, vector<1x32xf32>
    %c331 = arith.constant 331 : index
    %c0_54 = arith.constant 0 : index
    %127 = vector.load %arg1[%c331, %c0_54] : memref<512x128xf32, #tpu.memory_space<vmem>>, vector<1x32xf32>
    %c332 = arith.constant 332 : index
    %c0_55 = arith.constant 0 : index
    %128 = vector.load %arg1[%c332, %c0_55] : memref<512x128xf32, #tpu.memory_space<vmem>>, vector<1x32xf32>
    %c333 = arith.constant 333 : index
    %c0_56 = arith.constant 0 : index
    %129 = vector.load %arg1[%c333, %c0_56] : memref<512x128xf32, #tpu.memory_space<vmem>>, vector<1x32xf32>
    %c334 = arith.constant 334 : index
    %c0_57 = arith.constant 0 : index
    %130 = vector.load %arg1[%c334, %c0_57] : memref<512x128xf32, #tpu.memory_space<vmem>>, vector<1x128xf32>
    %c336 = arith.constant 336 : index
    %c0_58 = arith.constant 0 : index
    %131 = vector.load %arg1[%c336, %c0_58] : memref<512x128xf32, #tpu.memory_space<vmem>>, vector<32x32xf32>
    %c368 = arith.constant 368 : index
    %c0_59 = arith.constant 0 : index
    %132 = vector.load %arg1[%c368, %c0_59] : memref<512x128xf32, #tpu.memory_space<vmem>>, vector<32x8xf32>
    %c400 = arith.constant 400 : index
    %c0_60 = arith.constant 0 : index
    %133 = vector.load %arg1[%c400, %c0_60] : memref<512x128xf32, #tpu.memory_space<vmem>>, vector<32x32xf32>
    %c432 = arith.constant 432 : index
    %c0_61 = arith.constant 0 : index
    %134 = vector.load %arg1[%c432, %c0_61] : memref<512x128xf32, #tpu.memory_space<vmem>>, vector<16x16xf32>
    %c448 = arith.constant 448 : index
    %c0_62 = arith.constant 0 : index
    %135 = vector.load %arg1[%c448, %c0_62] : memref<512x128xf32, #tpu.memory_space<vmem>>, vector<32x128xf32>
    %c480 = arith.constant 480 : index
    %c0_63 = arith.constant 0 : index
    %136 = vector.load %arg1[%c480, %c0_63] : memref<512x128xf32, #tpu.memory_space<vmem>>, vector<32x128xf32>
    %cst_64 = arith.constant dense<0.000000e+00> : vector<16xf32>
    %137 = vector.multi_reduction <add>, %123, %cst_64 [1] : vector<16x32xf32> to vector<16xf32>
    %138 = vector.shape_cast %137 : vector<16xf32> to vector<16x1xf32>
    %cst_65 = arith.constant 3.200000e+01 : f32
    %139 = vector.broadcast %cst_65 : f32 to vector<16x1xf32>
    %140 = arith.divf %138, %139 : vector<16x1xf32>
    %141 = arith.mulf %123, %123 : vector<16x32xf32>
    %cst_66 = arith.constant dense<0.000000e+00> : vector<16xf32>
    %142 = vector.multi_reduction <add>, %141, %cst_66 [1] : vector<16x32xf32> to vector<16xf32>
    %143 = vector.shape_cast %142 : vector<16xf32> to vector<16x1xf32>
    %cst_67 = arith.constant 3.200000e+01 : f32
    %144 = vector.broadcast %cst_67 : f32 to vector<16x1xf32>
    %145 = arith.divf %143, %144 : vector<16x1xf32>
    %146 = arith.mulf %140, %140 : vector<16x1xf32>
    %147 = arith.subf %145, %146 : vector<16x1xf32>
    %148 = vector.broadcast %140 : vector<16x1xf32> to vector<16x32xf32>
    %149 = arith.subf %123, %148 : vector<16x32xf32>
    %cst_68 = arith.constant 9.99999974E-6 : f32
    %150 = vector.broadcast %cst_68 : f32 to vector<16x1xf32>
    %151 = arith.addf %147, %150 : vector<16x1xf32>
    %152 = math.rsqrt %151 : vector<16x1xf32>
    %153 = vector.broadcast %152 : vector<16x1xf32> to vector<16x32xf32>
    %154 = arith.mulf %149, %153 : vector<16x32xf32>
    %155 = vector.broadcast %124 : vector<1x32xf32> to vector<16x32xf32>
    %156 = arith.mulf %154, %155 : vector<16x32xf32>
    %157 = vector.broadcast %125 : vector<1x32xf32> to vector<16x32xf32>
    %158 = arith.addf %156, %157 : vector<16x32xf32>
    %cst_69 = arith.constant dense<0.000000e+00> : vector<16x32xf32>
    %159 = tpu.matmul %158, %131, %cst_69 {dimension_numbers = #tpu.dot_dimension_numbers<[1], [0], [0], [1], [0, 0, 1, 1], [], []>} : vector<16x32xf32>, vector<32x32xf32>, vector<16x32xf32> -> vector<16x32xf32>
    %cst_70 = arith.constant dense<0.000000e+00> : vector<16x8xf32>
    %160 = tpu.matmul %158, %132, %cst_70 {dimension_numbers = #tpu.dot_dimension_numbers<[1], [0], [0], [1], [0, 0, 1, 1], [], []>} : vector<16x32xf32>, vector<32x8xf32>, vector<16x8xf32> -> vector<16x8xf32>
    %cst_71 = arith.constant dense<0.000000e+00> : vector<16x8xf32>
    %161 = tpu.matmul %134, %160, %cst_71 {dimension_numbers = #tpu.dot_dimension_numbers<[1], [0], [0], [1], [0, 0, 1, 1], [], []>} : vector<16x16xf32>, vector<16x8xf32>, vector<16x8xf32> -> vector<16x8xf32>
    %162 = tpu.concatenate %161, %161, %161, %161 in 1 : vector<16x8xf32>, vector<16x8xf32>, vector<16x8xf32>, vector<16x8xf32> -> vector<16x32xf32>
    %163 = tpu.concatenate %162, %162, %162, %162 in 0 : vector<16x32xf32>, vector<16x32xf32>, vector<16x32xf32>, vector<16x32xf32> -> vector<64x32xf32>
    %164 = arith.mulf %163, %1 : vector<64x32xf32>
    %cst_72 = arith.constant dense<0.000000e+00> : vector<16x64xf32>
    %165 = tpu.matmul %159, %164, %cst_72 {dimension_numbers = #tpu.dot_dimension_numbers<[1], [1], [0], [0], [0, 0, 1, 0], [], []>} : vector<16x32xf32>, vector<64x32xf32>, vector<16x64xf32> -> vector<16x64xf32>
    %166 = arith.addf %165, %2 : vector<16x64xf32>
    %167 = math.exp %166 : vector<16x64xf32>
    %cst_73 = arith.constant dense<0.000000e+00> : vector<16x64xf32>
    %168 = tpu.matmul %167, %3, %cst_73 {dimension_numbers = #tpu.dot_dimension_numbers<[1], [0], [0], [1], [0, 0, 1, 1], [], []>} : vector<16x64xf32>, vector<64x64xf32>, vector<16x64xf32> -> vector<16x64xf32>
    %169 = arith.divf %167, %168 : vector<16x64xf32>
    %cst_74 = arith.constant dense<0.000000e+00> : vector<16x32xf32>
    %170 = tpu.matmul %169, %164, %cst_74 {dimension_numbers = #tpu.dot_dimension_numbers<[1], [0], [0], [1], [0, 0, 1, 1], [], []>} : vector<16x64xf32>, vector<64x32xf32>, vector<16x32xf32> -> vector<16x32xf32>
    %cst_75 = arith.constant dense<0.000000e+00> : vector<16x32xf32>
    %171 = tpu.matmul %170, %133, %cst_75 {dimension_numbers = #tpu.dot_dimension_numbers<[1], [0], [0], [1], [0, 0, 1, 1], [], []>} : vector<16x32xf32>, vector<32x32xf32>, vector<16x32xf32> -> vector<16x32xf32>
    %172 = arith.addf %123, %171 : vector<16x32xf32>
    %173 = vector.broadcast %128 : vector<1x32xf32> to vector<16x32xf32>
    %174 = arith.addf %172, %173 : vector<16x32xf32>
    %cst_76 = arith.constant dense<0.000000e+00> : vector<16xf32>
    %175 = vector.multi_reduction <add>, %174, %cst_76 [1] : vector<16x32xf32> to vector<16xf32>
    %176 = vector.shape_cast %175 : vector<16xf32> to vector<16x1xf32>
    %cst_77 = arith.constant 3.200000e+01 : f32
    %177 = vector.broadcast %cst_77 : f32 to vector<16x1xf32>
    %178 = arith.divf %176, %177 : vector<16x1xf32>
    %179 = arith.mulf %174, %174 : vector<16x32xf32>
    %cst_78 = arith.constant dense<0.000000e+00> : vector<16xf32>
    %180 = vector.multi_reduction <add>, %179, %cst_78 [1] : vector<16x32xf32> to vector<16xf32>
    %181 = vector.shape_cast %180 : vector<16xf32> to vector<16x1xf32>
    %cst_79 = arith.constant 3.200000e+01 : f32
    %182 = vector.broadcast %cst_79 : f32 to vector<16x1xf32>
    %183 = arith.divf %181, %182 : vector<16x1xf32>
    %184 = arith.mulf %178, %178 : vector<16x1xf32>
    %185 = arith.subf %183, %184 : vector<16x1xf32>
    %186 = vector.broadcast %178 : vector<16x1xf32> to vector<16x32xf32>
    %187 = arith.subf %174, %186 : vector<16x32xf32>
    %cst_80 = arith.constant 9.99999974E-6 : f32
    %188 = vector.broadcast %cst_80 : f32 to vector<16x1xf32>
    %189 = arith.addf %185, %188 : vector<16x1xf32>
    %190 = math.rsqrt %189 : vector<16x1xf32>
    %191 = vector.broadcast %190 : vector<16x1xf32> to vector<16x32xf32>
    %192 = arith.mulf %187, %191 : vector<16x32xf32>
    %193 = vector.broadcast %126 : vector<1x32xf32> to vector<16x32xf32>
    %194 = arith.mulf %192, %193 : vector<16x32xf32>
    %195 = vector.broadcast %127 : vector<1x32xf32> to vector<16x32xf32>
    %196 = arith.addf %194, %195 : vector<16x32xf32>
    %cst_81 = arith.constant dense<0.000000e+00> : vector<16x128xf32>
    %197 = tpu.matmul %196, %135, %cst_81 {dimension_numbers = #tpu.dot_dimension_numbers<[1], [0], [0], [1], [0, 0, 1, 1], [], []>} : vector<16x32xf32>, vector<32x128xf32>, vector<16x128xf32> -> vector<16x128xf32>
    %198 = vector.broadcast %130 : vector<1x128xf32> to vector<16x128xf32>
    %199 = arith.addf %197, %198 : vector<16x128xf32>
    %cst_82 = arith.constant 5.000000e-01 : f32
    %200 = vector.broadcast %cst_82 : f32 to vector<16x128xf32>
    %201 = arith.mulf %200, %199 : vector<16x128xf32>
    %cst_83 = arith.constant 0.707106769 : f32
    %202 = vector.broadcast %cst_83 : f32 to vector<16x128xf32>
    %203 = arith.mulf %199, %202 : vector<16x128xf32>
    %204 = math.absf %203 : vector<16x128xf32>
    %cst_84 = arith.constant 0.327591091 : f32
    %205 = vector.broadcast %cst_84 : f32 to vector<16x128xf32>
    %206 = arith.mulf %205, %204 : vector<16x128xf32>
    %cst_85 = arith.constant 1.000000e+00 : f32
    %207 = vector.broadcast %cst_85 : f32 to vector<16x128xf32>
    %208 = arith.addf %207, %206 : vector<16x128xf32>
    %cst_86 = arith.constant 1.000000e+00 : f32
    %209 = vector.broadcast %cst_86 : f32 to vector<16x128xf32>
    %210 = arith.divf %209, %208 : vector<16x128xf32>
    %cst_87 = arith.constant 1.06140542 : f32
    %211 = vector.broadcast %cst_87 : f32 to vector<16x128xf32>
    %212 = arith.mulf %211, %210 : vector<16x128xf32>
    %cst_88 = arith.constant -1.45315206 : f32
    %213 = vector.broadcast %cst_88 : f32 to vector<16x128xf32>
    %214 = arith.addf %212, %213 : vector<16x128xf32>
    %215 = arith.mulf %214, %210 : vector<16x128xf32>
    %cst_89 = arith.constant 1.42141378 : f32
    %216 = vector.broadcast %cst_89 : f32 to vector<16x128xf32>
    %217 = arith.addf %215, %216 : vector<16x128xf32>
    %218 = arith.mulf %217, %210 : vector<16x128xf32>
    %cst_90 = arith.constant -0.284496725 : f32
    %219 = vector.broadcast %cst_90 : f32 to vector<16x128xf32>
    %220 = arith.addf %218, %219 : vector<16x128xf32>
    %221 = arith.mulf %220, %210 : vector<16x128xf32>
    %cst_91 = arith.constant 0.254829586 : f32
    %222 = vector.broadcast %cst_91 : f32 to vector<16x128xf32>
    %223 = arith.addf %221, %222 : vector<16x128xf32>
    %224 = arith.mulf %223, %210 : vector<16x128xf32>
    %cst_92 = arith.constant 0.000000e+00 : f32
    %225 = vector.broadcast %cst_92 : f32 to vector<16x128xf32>
    %226 = arith.subf %225, %204 : vector<16x128xf32>
    %227 = arith.mulf %226, %204 : vector<16x128xf32>
    %228 = math.exp %227 : vector<16x128xf32>
    %229 = arith.mulf %224, %228 : vector<16x128xf32>
    %cst_93 = arith.constant 1.000000e+00 : f32
    %230 = vector.broadcast %cst_93 : f32 to vector<16x128xf32>
    %231 = arith.subf %230, %229 : vector<16x128xf32>
    %cst_94 = arith.constant 0.000000e+00 : f32
    %232 = vector.broadcast %cst_94 : f32 to vector<16x128xf32>
    %233 = arith.cmpf oge, %203, %232 : vector<16x128xf32>
    %cst_95 = arith.constant 0.000000e+00 : f32
    %234 = vector.broadcast %cst_95 : f32 to vector<16x128xf32>
    %235 = arith.subf %234, %231 : vector<16x128xf32>
    %236 = arith.select %233, %231, %235 : vector<16x128xi1>, vector<16x128xf32>
    %cst_96 = arith.constant 1.000000e+00 : f32
    %237 = vector.broadcast %cst_96 : f32 to vector<16x128xf32>
    %238 = arith.addf %237, %236 : vector<16x128xf32>
    %239 = arith.mulf %201, %238 : vector<16x128xf32>
    %cst_97 = arith.constant dense<0.000000e+00> : vector<16x32xf32>
    %240 = tpu.matmul %239, %136, %cst_97 {dimension_numbers = #tpu.dot_dimension_numbers<[1], [1], [0], [0], [0, 0, 1, 0], [], []>} : vector<16x128xf32>, vector<32x128xf32>, vector<16x32xf32> -> vector<16x32xf32>
    %241 = arith.addf %174, %240 : vector<16x32xf32>
    %242 = vector.broadcast %129 : vector<1x32xf32> to vector<16x32xf32>
    %243 = arith.addf %241, %242 : vector<16x32xf32>
    %c0_98 = arith.constant 0 : index
    %c0_99 = arith.constant 0 : index
    %244 = vector.load %arg2[%c0_98, %c0_99] : memref<16x32xf32, #tpu.memory_space<vmem>>, vector<16x32xf32>
    tpu.vector_store %arg2[%c0_98, %c0_99], %243 {strides = array<i32>} : memref<16x32xf32, #tpu.memory_space<vmem>>, vector<16x32xf32>,
    return
  }
}

</mosaic_0001>

<llo_original>
// kernel: efficient_transformer.1
$region0: #{efficient_transformer.1}
  #allocation0 [shape = 'u32[]', space=smem, size = 0x4, offset = 0x4, fixed_abs, tag = 'smem constant byte address 0x4 - core index']
  #allocation1 [shape = 'u32[72,128]{1,0:T(1,128)}', space=vmem, size = 0x9000, scoped, tag = 'internal scratch']
  %s0 = inlined_call_operand.hbm [shape: f32[16,32], index: 0, kind: input, shape index: {}]
  %s1 = inlined_call_operand.hbm [shape: f32[512,128], index: 1, kind: input, shape index: {}]
  %s2 = inlined_call_operand.hbm [shape: f32[16,32], index: 2, kind: output, shape index: {}]
  %s3 = sld [smem:[#allocation0]]
  $region26: #{efficient_transformer.1} parent=0
    _
  %s5 = ssub.s32 1, %s3
  %s6 = scalar_select 0, %s5, %s3
  $region1: #{efficient_transformer.1} parent=0
    #allocation2 [shape = 'u8[8192]{0}', space=vmem, size = 0x2000, scoped, tag = 'input window, operand 0, single buffered']
    #allocation3 [shape = 's32[1]{0}', space=sflag, size = 0x4, scoped, tag = 'scoped memory for efficient_transformer.1']
    #allocation4 [shape = 's32[1]{0}', space=sflag, size = 0x4, scoped, tag = 'scoped memory for efficient_transformer.1']
    #allocation5 [shape = 'u8[262144]{0}', space=vmem, size = 0x40000, scoped, tag = 'input window, operand 1, single buffered']
    #allocation6 [shape = 's32[1]{0}', space=sflag, size = 0x4, scoped, tag = 'scoped memory for efficient_transformer.1']
    #allocation7 [shape = 'u8[8192]{0}', space=vmem, size = 0x2000, scoped, tag = 'output window, operand 0, single buffered']
    %7 = vsyncpa [#allocation3], 0
    %8 = vsyncpa [#allocation6], 0
    %9 = vsyncpa [#allocation4], 0
    // Predicated region
    $region2: #{efficient_transformer.1} parent=1 // pred_check
      _
    $region3: #{efficient_transformer.1} parent=1 // pred_check_branch
      %11 = sbr.rel (0) target = $region5
    $region4: #{efficient_transformer.1} parent=1 // pred_region
      %13 = vsyncadd [#allocation3], 0
      %s14 = sshll.u32 %s0, 4
      %s15 = int_to_ptr.hbm [resolvable:$true] %s14
      %s16 = sshll.u32 [#allocation2], 4
      %s17 = int_to_ptr.vmem [resolvable:$true] %s16
      %22 = dma.hbm_to_vmem [thread:$0]  %s15, 256, %s17, [#allocation3], 128, 128, 8
    $region5: #{efficient_transformer.1} parent=1 // pred_fallthru
      _
    // Predicated region
    $region6: #{efficient_transformer.1} parent=1 // pred_check
      _
    $region7: #{efficient_transformer.1} parent=1 // pred_check_branch
      %24 = sbr.rel (0) target = $region9
    $region8: #{efficient_transformer.1} parent=1 // pred_region
      %26 = vsyncadd [#allocation6], 0
      %s27 = sshll.u32 %s1, 4
      %s28 = int_to_ptr.hbm [resolvable:$true] %s27
      %s29 = sshll.u32 [#allocation5], 4
      %s30 = int_to_ptr.vmem [resolvable:$true] %s29
      %35 = dma.hbm_to_vmem [thread:$0]  %s28, 8192, %s30, [#allocation6], 128, 128, 8
    $region9: #{efficient_transformer.1} parent=1 // pred_fallthru
      _
    // Predicated region
    $region10: #{efficient_transformer.1} parent=1 // pred_check
      _
    $region11: #{efficient_transformer.1} parent=1 // pred_check_branch
      %37 = sbr.rel (0) target = $region13
    $region12: #{efficient_transformer.1} parent=1 // pred_region
      %39 = dma.done [#allocation3], 256
    $region13: #{efficient_transformer.1} parent=1 // pred_fallthru
      _
    // Predicated region
    $region14: #{efficient_transformer.1} parent=1 // pred_check
      _
    $region15: #{efficient_transformer.1} parent=1 // pred_check_branch
      %41 = sbr.rel (0) target = $region17
    $region16: #{efficient_transformer.1} parent=1 // pred_region
      %43 = dma.done [#allocation6], 8192
    $region17: #{efficient_transformer.1} parent=1 // pred_fallthru
      _
    %v44 = vld [vmem:[#allocation2] sm:$0xff]
    %v45 = vld [vmem:[#allocation2 + $0x8] sm:$0xff]
    %v46 = vld [vmem:[#allocation5] sm:$0xff]
    %v47 = vld [vmem:[#allocation5 + $0x8] sm:$0xff]
    %v48 = vld [vmem:[#allocation5 + $0x10] sm:$0xff]
    %v49 = vld [vmem:[#allocation5 + $0x18] sm:$0xff]
    %v50 = vld [vmem:[#allocation5 + $0x20] sm:$0xff]
    %v51 = vld [vmem:[#allocation5 + $0x28] sm:$0xff]
    %v52 = vld [vmem:[#allocation5 + $0x30] sm:$0xff]
    %v53 = vld [vmem:[#allocation5 + $0x38] sm:$0xff]
    %v54 = vld [vmem:[#allocation5 + $0x40] sm:$0xff]
    %v55 = vld [vmem:[#allocation5 + $0x48] sm:$0xff]
    %v56 = vld [vmem:[#allocation5 + $0x50] sm:$0xff]
    %v57 = vld [vmem:[#allocation5 + $0x58] sm:$0xff]
    %v58 = vld [vmem:[#allocation5 + $0x60] sm:$0xff]
    %v59 = vld [vmem:[#allocation5 + $0x68] sm:$0xff]
    %v60 = vld [vmem:[#allocation5 + $0x70] sm:$0xff]
    %v61 = vld [vmem:[#allocation5 + $0x78] sm:$0xff]
    %v62 = vld [vmem:[#allocation5 + $0x80] sm:$0xff]
    %v63 = vld [vmem:[#allocation5 + $0x88] sm:$0xff]
    %v64 = vld [vmem:[#allocation5 + $0x90] sm:$0x1]
    %v65 = vld [vmem:[#allocation5 + $0x91] sm:$0x1]
    %v66 = vld [vmem:[#allocation5 + $0x92] sm:$0x1]
    %v67 = vld [vmem:[#allocation5 + $0x93] sm:$0x1]
    %v68 = vld [vmem:[#allocation5 + $0x94] sm:$0x1]
    %v69 = vld [vmem:[#allocation5 + $0x95] sm:$0x1]
    %v70 = vld [vmem:[#allocation5 + $0x96] sm:$0x1]
    %v71 = vld [vmem:[#allocation5 + $0x98] sm:$0xff]
    %v72 = vld [vmem:[#allocation5 + $0xa0] sm:$0xff]
    %v73 = vld [vmem:[#allocation5 + $0xa8] sm:$0xff]
    %v74 = vld [vmem:[#allocation5 + $0xb0] sm:$0xff]
    %v75 = vld [vmem:[#allocation5 + $0xb8] sm:$0xff]
    %v76 = vld [vmem:[#allocation5 + $0xc0] sm:$0xff]
    %v77 = vld [vmem:[#allocation5 + $0xc8] sm:$0xff]
    %v78 = vld [vmem:[#allocation5 + $0xd0] sm:$0xff]
    %v79 = vld [vmem:[#allocation5 + $0xd8] sm:$0xff]
    %v80 = vld [vmem:[#allocation5 + $0xe0] sm:$0xff]
    %v81 = vld [vmem:[#allocation5 + $0xe8] sm:$0xff]
    %v82 = vld [vmem:[#allocation5 + $0xf0] sm:$0xff]
    %v83 = vld [vmem:[#allocation5 + $0xf8] sm:$0xff]
    %v84 = vld [vmem:[#allocation5 + $0x100] sm:$0xff]
    %v85 = vld [vmem:[#allocation5 + $0x108] sm:$0xff]
    %v86 = vld [vmem:[#allocation5 + $0x110] sm:$0xff]
    %v87 = vld [vmem:[#allocation5 + $0x118] sm:$0xff]
    %v88 = vld [vmem:[#allocation5 + $0x120] sm:$0xff]
    %v89 = vld [vmem:[#allocation5 + $0x128] sm:$0xff]
    %v90 = vld [vmem:[#allocation5 + $0x130] sm:$0xff]
    %v91 = vld [vmem:[#allocation5 + $0x138] sm:$0xff]
    %v92 = vld [vmem:[#allocation5 + $0x140] sm:$0xff]
    %vm93 = vcmask 261120
    %v94 = vsel %vm93, %v44, 0.0
    %95 = vadd.xlane.f32.xlu0 %v94
    %v96 = vpop.xlane.xlu0 %95
    %v97 = vsel %vm93, %v45, 0.0
    %98 = vadd.xlane.f32.xlu0 %v97
    %v99 = vpop.xlane.xlu0 %98
    %v100 = vrcp.pop 32.0
    %v101 = vmul.f32 32.0, %v100
    %v102 = vsub.f32 1.0, %v101
    %v103 = vmul.f32 %v100, %v102
    %v104 = vadd.f32 %v100, %v103
    %vm105 = vweird.f32 %v100
    %v106 = vsel %vm105, %v100, %v104
    %v107 = vmul.f32 %v96, %v106
    %v108 = vmul.f32 %v99, %v106
    %v109 = vmul.f32 %v44, %v44
    %v110 = vmul.f32 %v45, %v45
    %v111 = vsel %vm93, %v109, 0.0
    %112 = vadd.xlane.f32.xlu0 %v111
    %v113 = vpop.xlane.xlu0 %112
    %v114 = vsel %vm93, %v110, 0.0
    %115 = vadd.xlane.f32.xlu0 %v114
    %v116 = vpop.xlane.xlu0 %115
    %v117 = vmul.f32 %v113, %v106
    %v118 = vmul.f32 %v116, %v106
    %v119 = vmul.f32 %v107, %v107
    %v120 = vmul.f32 %v108, %v108
    %v121 = vsub.f32 %v117, %v119
    %v122 = vsub.f32 %v118, %v120
    %v123 = vsub.f32 %v44, %v107
    %v124 = vsub.f32 %v45, %v108
    %v125 = vadd.f32 %v121, 1e-05
    %v126 = vadd.f32 %v122, 1e-05
    %v127 = vrsqrt.pop %v125
    %v128 = vmul.f32 %v127, %v125
    %v129 = vmul.f32 %v128, %v127
    %v130 = vmul.f32 0.5, %v129
    %v131 = vsub.f32 1.5, %v130
    %v132 = vmul.f32 %v127, %v131
    %vm133 = vweird.f32 %v125
    %vm134 = vweird.f32 %v127
    %vm135 = vmor %vm133, %vm134
    %v136 = vsel %vm135, %v127, %v132
    %v137 = vrsqrt.pop %v126
    %v138 = vmul.f32 %v137, %v126
    %v139 = vmul.f32 %v138, %v137
    %v140 = vmul.f32 0.5, %v139
    %v141 = vsub.f32 1.5, %v140
    %v142 = vmul.f32 %v137, %v141
    %vm143 = vweird.f32 %v126
    %vm144 = vweird.f32 %v137
    %vm145 = vmor %vm143, %vm144
    %v146 = vsel %vm145, %v137, %v142
    %v147 = vmul.f32 %v123, %v136
    %v148 = vmul.f32 %v124, %v146
    %v149 = vperm.slane %v64, 0
    %v150 = vmul.f32 %v147, %v149
    %v151 = vmul.f32 %v148, %v149
    %v152 = vperm.slane %v65, 0
    %v153 = vadd.f32 %v150, %v152
    %v154 = vadd.f32 %v151, %v152
    %v156 = vsel %vm93, %v153, 0
    %v159 = vsel %vm93, %v154, 0
    %161 = vmatpush.msra.mxu0 0.0
    %162 = vmatpush.msra.mxu0 0.0
    %163 = vmatpush.msra.mxu0 0.0
    %164 = vmatpush.msra.mxu0 0.0
    %165 = vmatpush.msra.mxu0 0.0
    %166 = vmatpush.msra.mxu0 0.0
    %167 = vmatpush.msra.mxu0 0.0
    %168 = vmatpush.msra.mxu0 0.0
    %169 = vmatpush.msra.mxu0 0.0
    %170 = vmatpush.msra.mxu0 0.0
    %171 = vmatpush.msra.mxu0 0.0
    %172 = vmatpush.msra.mxu0 0.0
    %173 = vmatpush.msra.mxu0 %v74
    %174 = vmatpush.msra.mxu0 %v73
    %175 = vmatpush.msra.mxu0 %v72
    %176 = vmatpush.msra.mxu0 %v71
    %177 = vmatmul.f32.gmra.mxu0 %v156
    %v178 = vpop.f32.mrf.mxu0
    %v179 = vadd.f32 0.0, %v178
    %180 = vmatmul.f32.gmra.mxu0 %v159
    %v181 = vpop.f32.mrf.mxu0
    %v182 = vadd.f32 0.0, %v181
    %183 = vdwg.mxu0
    %184 = vmatpush.msra.mxu0 0.0
    %185 = vmatpush.msra.mxu0 0.0
    %186 = vmatpush.msra.mxu0 0.0
    %187 = vmatpush.msra.mxu0 0.0
    %188 = vmatpush.msra.mxu0 0.0
    %189 = vmatpush.msra.mxu0 0.0
    %190 = vmatpush.msra.mxu0 0.0
    %191 = vmatpush.msra.mxu0 0.0
    %192 = vmatpush.msra.mxu0 0.0
    %193 = vmatpush.msra.mxu0 0.0
    %194 = vmatpush.msra.mxu0 0.0
    %195 = vmatpush.msra.mxu0 0.0
    %196 = vmatpush.msra.mxu0 %v78
    %197 = vmatpush.msra.mxu0 %v77
    %198 = vmatpush.msra.mxu0 %v76
    %199 = vmatpush.msra.mxu0 %v75
    %200 = vmatmul.f32.gmra.mxu0 %v156
    %v201 = vpop.f32.mrf.mxu0
    %v202 = vadd.f32 0.0, %v201
    %203 = vmatmul.f32.gmra.mxu0 %v159
    %v204 = vpop.f32.mrf.mxu0
    %v205 = vadd.f32 0.0, %v204
    %206 = vdwg.mxu0
    %vm207 = vcmask 130048
    %v209 = vsel %vm207, %v83, 0
    %v212 = vsel %vm207, %v84, 0
    %214 = vmatpush.msra.mxu0 0.0
    %215 = vmatpush.msra.mxu0 0.0
    %216 = vmatpush.msra.mxu0 0.0
    %217 = vmatpush.msra.mxu0 0.0
    %218 = vmatpush.msra.mxu0 0.0
    %219 = vmatpush.msra.mxu0 0.0
    %220 = vmatpush.msra.mxu0 0.0
    %221 = vmatpush.msra.mxu0 0.0
    %222 = vmatpush.msra.mxu0 0.0
    %223 = vmatpush.msra.mxu0 0.0
    %224 = vmatpush.msra.mxu0 0.0
    %225 = vmatpush.msra.mxu0 0.0
    %226 = vmatpush.msra.mxu0 0.0
    %227 = vmatpush.msra.mxu0 0.0
    %228 = vmatpush.msra.mxu0 %v205
    %229 = vmatpush.msra.mxu0 %v202
    %230 = vmatmul.f32.gmra.mxu0 %v209
    %v231 = vpop.f32.mrf.mxu0
    %v232 = vadd.f32 0.0, %v231
    %233 = vmatmul.f32.gmra.mxu0 %v212
    %v234 = vpop.f32.mrf.mxu0
    %v235 = vadd.f32 0.0, %v234
    %236 = vdwg.mxu0
    %239 = vrot.lane.b32.xlu0 %v232, 8
    %v240 = vpop.permute.xlu0 %239
    %241 = vrot.lane.b32.xlu0 %v235, 8
    %v242 = vpop.permute.xlu0 %241
    %245 = vrot.lane.b32.xlu0 %v232, 16
    %v246 = vpop.permute.xlu0 %245
    %247 = vrot.lane.b32.xlu0 %v235, 16
    %v248 = vpop.permute.xlu0 %247
    %251 = vrot.lane.b32.xlu0 %v232, 24
    %v252 = vpop.permute.xlu0 %251
    %253 = vrot.lane.b32.xlu0 %v235, 24
    %v254 = vpop.permute.xlu0 %253
    %vm257 = vcmask 64512
    %v258 = vsel %vm257, %v232, %v240
    %v259 = vsel %vm257, %v235, %v242
    %v260 = vsel %vm207, %v258, %v246
    %v261 = vsel %vm207, %v259, %v248
    %vm262 = vcmask 195584
    %v263 = vsel %vm262, %v260, %v252
    %v264 = vsel %vm262, %v261, %v254
    %v265 = vmul.f32 %v263, %v46
    %v266 = vmul.f32 %v264, %v47
    %v267 = vmul.f32 %v263, %v48
    %v268 = vmul.f32 %v264, %v49
    %v269 = vmul.f32 %v263, %v50
    %v270 = vmul.f32 %v264, %v51
    %v271 = vmul.f32 %v263, %v52
    %v272 = vmul.f32 %v264, %v53
    %v274 = vsel %vm93, %v179, 0
    %v277 = vsel %vm93, %v182, 0
    %v280 = vsel %vm93, %v265, 0
    %v283 = vsel %vm93, %v266, 0
    %v286 = vsel %vm93, %v267, 0
    %v289 = vsel %vm93, %v268, 0
    %v292 = vsel %vm93, %v269, 0
    %v295 = vsel %vm93, %v270, 0
    %v298 = vsel %vm93, %v271, 0
    %v301 = vsel %vm93, %v272, 0
    %303 = vmatpush.xpose.msra.mxu0 0.0
    %304 = vmatpush.xpose.msra.mxu0 0.0
    %305 = vmatpush.xpose.msra.mxu0 0.0
    %306 = vmatpush.xpose.msra.mxu0 0.0
    %307 = vmatpush.xpose.msra.mxu0 0.0
    %308 = vmatpush.xpose.msra.mxu0 0.0
    %309 = vmatpush.xpose.msra.mxu0 0.0
    %310 = vmatpush.xpose.msra.mxu0 0.0
    %311 = vmatpush.xpose.msra.mxu0 %v301
    %312 = vmatpush.xpose.msra.mxu0 %v298
    %313 = vmatpush.xpose.msra.mxu0 %v295
    %314 = vmatpush.xpose.msra.mxu0 %v292
    %315 = vmatpush.xpose.msra.mxu0 %v289
    %316 = vmatpush.xpose.msra.mxu0 %v286
    %317 = vmatpush.xpose.msra.mxu0 %v283
    %318 = vmatpush.xpose.msra.mxu0 %v280
    %319 = vmatmul.f32.gmra.mxu0 %v274
    %v320 = vpop.f32.mrf.mxu0
    %v321 = vadd.f32 %v54, %v320
    %322 = vmatmul.f32.gmra.mxu0 %v277
    %v323 = vpop.f32.mrf.mxu0
    %v324 = vadd.f32 %v55, %v323
    %325 = vdwg.mxu0
    %v326 = vmul.f32 %v321, 1.442695
    %v327 = vpow.pop %v326
    %v328 = vmul.f32 %v324, 1.442695
    %v329 = vpow.pop %v328
    %vm330 = vcmask 523264
    %v332 = vsel %vm330, %v327, 0
    %v335 = vsel %vm330, %v329, 0
    %337 = vmatpush.msra.mxu0 0.0
    %338 = vmatpush.msra.mxu0 0.0
    %339 = vmatpush.msra.mxu0 0.0
    %340 = vmatpush.msra.mxu0 0.0
    %341 = vmatpush.msra.mxu0 0.0
    %342 = vmatpush.msra.mxu0 0.0
    %343 = vmatpush.msra.mxu0 0.0
    %344 = vmatpush.msra.mxu0 0.0
    %345 = vmatpush.msra.mxu0 %v63
    %346 = vmatpush.msra.mxu0 %v62
    %347 = vmatpush.msra.mxu0 %v61
    %348 = vmatpush.msra.mxu0 %v60
    %349 = vmatpush.msra.mxu0 %v59
    %350 = vmatpush.msra.mxu0 %v58
    %351 = vmatpush.msra.mxu0 %v57
    %352 = vmatpush.msra.mxu0 %v56
    %353 = vmatmul.f32.gmra.mxu0 %v332
    %v354 = vpop.f32.mrf.mxu0
    %v355 = vadd.f32 0.0, %v354
    %356 = vmatmul.f32.gmra.mxu0 %v335
    %v357 = vpop.f32.mrf.mxu0
    %v358 = vadd.f32 0.0, %v357
    %359 = vdwg.mxu0
    %v360 = vrcp.pop %v355
    %v361 = vmul.f32 %v355, %v360
    %v362 = vsub.f32 1.0, %v361
    %v363 = vmul.f32 %v360, %v362
    %v364 = vadd.f32 %v360, %v363
    %vm365 = vweird.f32 %v355
    %vm366 = vweird.f32 %v360
    %vm367 = vmor %vm365, %vm366
    %v368 = vsel %vm367, %v360, %v364
    %v369 = vand.u32 2147483647, %v355
    %vm370 = vcmp.eq.f32.partialorder %v369, 8.507059e+37
    %v371 = vand.u32 %v355, 2147483648
    %v372 = vor.u32 1.1754944e-38, %v371
    %v373 = vsel %vm370, %v372, %v368
    %v374 = vmul.f32 %v327, %v373
    %v375 = vrcp.pop %v358
    %v376 = vmul.f32 %v358, %v375
    %v377 = vsub.f32 1.0, %v376
    %v378 = vmul.f32 %v375, %v377
    %v379 = vadd.f32 %v375, %v378
    %vm380 = vweird.f32 %v358
    %vm381 = vweird.f32 %v375
    %vm382 = vmor %vm380, %vm381
    %v383 = vsel %vm382, %v375, %v379
    %v384 = vand.u32 2147483647, %v358
    %vm385 = vcmp.eq.f32.partialorder %v384, 8.507059e+37
    %v386 = vand.u32 %v358, 2147483648
    %v387 = vor.u32 1.1754944e-38, %v386
    %v388 = vsel %vm385, %v387, %v383
    %v389 = vmul.f32 %v329, %v388
    %v391 = vsel %vm330, %v374, 0
    %v394 = vsel %vm330, %v389, 0
    %396 = vmatpush.msra.mxu0 0.0
    %397 = vmatpush.msra.mxu0 0.0
    %398 = vmatpush.msra.mxu0 0.0
    %399 = vmatpush.msra.mxu0 0.0
    %400 = vmatpush.msra.mxu0 0.0
    %401 = vmatpush.msra.mxu0 0.0
    %402 = vmatpush.msra.mxu0 0.0
    %403 = vmatpush.msra.mxu0 0.0
    %404 = vmatpush.msra.mxu0 %v272
    %405 = vmatpush.msra.mxu0 %v271
    %406 = vmatpush.msra.mxu0 %v270
    %407 = vmatpush.msra.mxu0 %v269
    %408 = vmatpush.msra.mxu0 %v268
    %409 = vmatpush.msra.mxu0 %v267
    %410 = vmatpush.msra.mxu0 %v266
    %411 = vmatpush.msra.mxu0 %v265
    %412 = vmatmul.f32.gmra.mxu0 %v391
    %v413 = vpop.f32.mrf.mxu0
    %v414 = vadd.f32 0.0, %v413
    %415 = vmatmul.f32.gmra.mxu0 %v394
    %v416 = vpop.f32.mrf.mxu0
    %v417 = vadd.f32 0.0, %v416
    %418 = vdwg.mxu0
    %v420 = vsel %vm93, %v414, 0
    %v423 = vsel %vm93, %v417, 0
    %425 = vmatpush.msra.mxu0 0.0
    %426 = vmatpush.msra.mxu0 0.0
    %427 = vmatpush.msra.mxu0 0.0
    %428 = vmatpush.msra.mxu0 0.0
    %429 = vmatpush.msra.mxu0 0.0
    %430 = vmatpush.msra.mxu0 0.0
    %431 = vmatpush.msra.mxu0 0.0
    %432 = vmatpush.msra.mxu0 0.0
    %433 = vmatpush.msra.mxu0 0.0
    %434 = vmatpush.msra.mxu0 0.0
    %435 = vmatpush.msra.mxu0 0.0
    %436 = vmatpush.msra.mxu0 0.0
    %437 = vmatpush.msra.mxu0 %v82
    %438 = vmatpush.msra.mxu0 %v81
    %439 = vmatpush.msra.mxu0 %v80
    %440 = vmatpush.msra.mxu0 %v79
    %441 = vmatmul.f32.gmra.mxu0 %v420
    %v442 = vpop.f32.mrf.mxu0
    %v443 = vadd.f32 0.0, %v442
    %444 = vmatmul.f32.gmra.mxu0 %v423
    %v445 = vpop.f32.mrf.mxu0
    %v446 = vadd.f32 0.0, %v445
    %447 = vdwg.mxu0
    %v448 = vadd.f32 %v44, %v443
    %v449 = vadd.f32 %v45, %v446
    %v450 = vperm.slane %v68, 0
    %v451 = vadd.f32 %v448, %v450
    %v452 = vadd.f32 %v449, %v450
    %v453 = vsel %vm93, %v451, 0.0
    %454 = vadd.xlane.f32.xlu0 %v453
    %v455 = vpop.xlane.xlu0 %454
    %v456 = vsel %vm93, %v452, 0.0
    %457 = vadd.xlane.f32.xlu0 %v456
    %v458 = vpop.xlane.xlu0 %457
    %v459 = vmul.f32 %v455, %v106
    %v460 = vmul.f32 %v458, %v106
    %v461 = vmul.f32 %v451, %v451
    %v462 = vmul.f32 %v452, %v452
    %v463 = vsel %vm93, %v461, 0.0
    %464 = vadd.xlane.f32.xlu0 %v463
    %v465 = vpop.xlane.xlu0 %464
    %v466 = vsel %vm93, %v462, 0.0
    %467 = vadd.xlane.f32.xlu0 %v466
    %v468 = vpop.xlane.xlu0 %467
    %v469 = vmul.f32 %v465, %v106
    %v470 = vmul.f32 %v468, %v106
    %v471 = vmul.f32 %v459, %v459
    %v472 = vmul.f32 %v460, %v460
    %v473 = vsub.f32 %v469, %v471
    %v474 = vsub.f32 %v470, %v472
    %v475 = vsub.f32 %v451, %v459
    %v476 = vsub.f32 %v452, %v460
    %v477 = vadd.f32 %v473, 1e-05
    %v478 = vadd.f32 %v474, 1e-05
    %v479 = vrsqrt.pop %v477
    %v480 = vmul.f32 %v479, %v477
    %v481 = vmul.f32 %v480, %v479
    %v482 = vmul.f32 0.5, %v481
    %v483 = vsub.f32 1.5, %v482
    %v484 = vmul.f32 %v479, %v483
    %vm485 = vweird.f32 %v477
    %vm486 = vweird.f32 %v479
    %vm487 = vmor %vm485, %vm486
    %v488 = vsel %vm487, %v479, %v484
    %v489 = vrsqrt.pop %v478
    %v490 = vmul.f32 %v489, %v478
    %v491 = vmul.f32 %v490, %v489
    %v492 = vmul.f32 0.5, %v491
    %v493 = vsub.f32 1.5, %v492
    %v494 = vmul.f32 %v489, %v493
    %vm495 = vweird.f32 %v478
    %vm496 = vweird.f32 %v489
    %vm497 = vmor %vm495, %vm496
    %v498 = vsel %vm497, %v489, %v494
    %v499 = vmul.f32 %v475, %v488
    %v500 = vmul.f32 %v476, %v498
    %v501 = vperm.slane %v66, 0
    %v502 = vmul.f32 %v499, %v501
    %v503 = vmul.f32 %v500, %v501
    %v504 = vperm.slane %v67, 0
    %v505 = vadd.f32 %v502, %v504
    %v506 = vadd.f32 %v503, %v504
    %v507 = vperm.slane %v70, 0
    %v509 = vsel %vm93, %v505, 0
    %v512 = vsel %vm93, %v506, 0
    %514 = vmatpush.msra.mxu0 0.0
    %515 = vmatpush.msra.mxu0 0.0
    %516 = vmatpush.msra.mxu0 0.0
    %517 = vmatpush.msra.mxu0 0.0
    %518 = vmatpush.msra.mxu0 0.0
    %519 = vmatpush.msra.mxu0 0.0
    %520 = vmatpush.msra.mxu0 0.0
    %521 = vmatpush.msra.mxu0 0.0
    %522 = vmatpush.msra.mxu0 0.0
    %523 = vmatpush.msra.mxu0 0.0
    %524 = vmatpush.msra.mxu0 0.0
    %525 = vmatpush.msra.mxu0 0.0
    %526 = vmatpush.msra.mxu0 %v88
    %527 = vmatpush.msra.mxu0 %v87
    %528 = vmatpush.msra.mxu0 %v86
    %529 = vmatpush.msra.mxu0 %v85
    %530 = vmatmul.f32.gmra.mxu0 %v509
    %v531 = vpop.f32.mrf.mxu0
    %v532 = vadd.f32 %v507, %v531
    %533 = vmatmul.f32.gmra.mxu0 %v512
    %v534 = vpop.f32.mrf.mxu0
    %v535 = vadd.f32 %v507, %v534
    %536 = vdwg.mxu0
    %v537 = vmul.f32 %v532, 0.5
    %v538 = vmul.f32 %v535, 0.5
    %v539 = vmul.f32 %v532, 0.70710677
    %v540 = vmul.f32 %v535, 0.70710677
    %v541 = vand.u32 2147483647, %v539
    %v542 = vand.u32 2147483647, %v540
    %v543 = vmul.f32 %v541, 0.3275911
    %v544 = vmul.f32 %v542, 0.3275911
    %v545 = vadd.f32 %v543, 1.0
    %v546 = vadd.f32 %v544, 1.0
    %v547 = vrcp.pop %v545
    %v548 = vmul.f32 %v545, %v547
    %v549 = vsub.f32 1.0, %v548
    %v550 = vmul.f32 %v547, %v549
    %v551 = vadd.f32 %v547, %v550
    %vm552 = vweird.f32 %v545
    %vm553 = vweird.f32 %v547
    %vm554 = vmor %vm552, %vm553
    %v555 = vsel %vm554, %v547, %v551
    %v556 = vand.u32 2147483647, %v545
    %vm557 = vcmp.eq.f32.partialorder %v556, 8.507059e+37
    %v558 = vand.u32 %v545, 2147483648
    %v559 = vor.u32 1.1754944e-38, %v558
    %v560 = vsel %vm557, %v559, %v555
    %v561 = vmul.f32 1.0, %v560
    %v562 = vrcp.pop %v546
    %v563 = vmul.f32 %v546, %v562
    %v564 = vsub.f32 1.0, %v563
    %v565 = vmul.f32 %v562, %v564
    %v566 = vadd.f32 %v562, %v565
    %vm567 = vweird.f32 %v546
    %vm568 = vweird.f32 %v562
    %vm569 = vmor %vm567, %vm568
    %v570 = vsel %vm569, %v562, %v566
    %v571 = vand.u32 2147483647, %v546
    %vm572 = vcmp.eq.f32.partialorder %v571, 8.507059e+37
    %v573 = vand.u32 %v546, 2147483648
    %v574 = vor.u32 1.1754944e-38, %v573
    %v575 = vsel %vm572, %v574, %v570
    %v576 = vmul.f32 1.0, %v575
    %v577 = vmul.f32 %v561, 1.0614054
    %v578 = vmul.f32 %v576, 1.0614054
    %v579 = vadd.f32 %v577, -1.4531521
    %v580 = vadd.f32 %v578, -1.4531521
    %v581 = vmul.f32 %v579, %v561
    %v582 = vmul.f32 %v580, %v576
    %v583 = vadd.f32 %v581, 1.4214138
    %v584 = vadd.f32 %v582, 1.4214138
    %v585 = vmul.f32 %v583, %v561
    %v586 = vmul.f32 %v584, %v576
    %v587 = vadd.f32 %v585, -0.28449672
    %v588 = vadd.f32 %v586, -0.28449672
    %v589 = vmul.f32 %v587, %v561
    %v590 = vmul.f32 %v588, %v576
    %v591 = vadd.f32 %v589, 0.2548296
    %v592 = vadd.f32 %v590, 0.2548296
    %v593 = vmul.f32 %v591, %v561
    %v594 = vmul.f32 %v592, %v576
    %v595 = vsub.f32 0.0, %v541
    %v596 = vsub.f32 0.0, %v542
    %v597 = vmul.f32 %v595, %v541
    %v598 = vmul.f32 %v596, %v542
    %v599 = vmul.f32 %v597, 1.442695
    %v600 = vpow.pop %v599
    %v601 = vmul.f32 %v598, 1.442695
    %v602 = vpow.pop %v601
    %v603 = vmul.f32 %v593, %v600
    %v604 = vmul.f32 %v594, %v602
    %v605 = vsub.f32 1.0, %v603
    %v606 = vsub.f32 1.0, %v604
    %vm607 = vcmp.ge.f32.partialorder %v539, 0.0
    %vm608 = vcmp.ge.f32.partialorder %v540, 0.0
    %v609 = vsub.f32 0.0, %v605
    %v610 = vsub.f32 0.0, %v606
    %v611 = vsel %vm607, %v605, %v609
    %v612 = vsel %vm608, %v606, %v610
    %v613 = vadd.f32 %v611, 1.0
    %v614 = vadd.f32 %v612, 1.0
    %v615 = vmul.f32 %v537, %v613
    %v616 = vmul.f32 %v538, %v614
    %617 = vmatpush.xpose.msra.mxu0 0.0
    %618 = vmatpush.xpose.msra.mxu0 0.0
    %619 = vmatpush.xpose.msra.mxu0 0.0
    %620 = vmatpush.xpose.msra.mxu0 0.0
    %621 = vmatpush.xpose.msra.mxu0 0.0
    %622 = vmatpush.xpose.msra.mxu0 0.0
    %623 = vmatpush.xpose.msra.mxu0 0.0
    %624 = vmatpush.xpose.msra.mxu0 0.0
    %625 = vmatpush.xpose.msra.mxu0 0.0
    %626 = vmatpush.xpose.msra.mxu0 0.0
    %627 = vmatpush.xpose.msra.mxu0 0.0
    %628 = vmatpush.xpose.msra.mxu0 0.0
    %629 = vmatpush.xpose.msra.mxu0 %v92
    %630 = vmatpush.xpose.msra.mxu0 %v91
    %631 = vmatpush.xpose.msra.mxu0 %v90
    %632 = vmatpush.xpose.msra.mxu0 %v89
    %633 = vmatmul.f32.gmra.mxu0 %v615
    %v634 = vpop.f32.mrf.mxu0
    %v635 = vadd.f32 0.0, %v634
    %636 = vmatmul.f32.gmra.mxu0 %v616
    %v637 = vpop.f32.mrf.mxu0
    %v638 = vadd.f32 0.0, %v637
    %639 = vdwg.mxu0
    %v640 = vadd.f32 %v451, %v635
    %v641 = vadd.f32 %v452, %v638
    %v642 = vperm.slane %v69, 0
    %v643 = vadd.f32 %v640, %v642
    %v644 = vadd.f32 %v641, %v642
    %v645 = vld [vmem:[#allocation5 + $0x148] sm:$0x1]
    %v646 = vld [vmem:[#allocation5 + $0x149] sm:$0x1]
    %v647 = vld [vmem:[#allocation5 + $0x14a] sm:$0x1]
    %v648 = vld [vmem:[#allocation5 + $0x14b] sm:$0x1]
    %v649 = vld [vmem:[#allocation5 + $0x14c] sm:$0x1]
    %v650 = vld [vmem:[#allocation5 + $0x14d] sm:$0x1]
    %v651 = vld [vmem:[#allocation5 + $0x14e] sm:$0x1]
    %v652 = vld [vmem:[#allocation5 + $0x150] sm:$0xff]
    %v653 = vld [vmem:[#allocation5 + $0x158] sm:$0xff]
    %v654 = vld [vmem:[#allocation5 + $0x160] sm:$0xff]
    %v655 = vld [vmem:[#allocation5 + $0x168] sm:$0xff]
    %v656 = vld [vmem:[#allocation5 + $0x170] sm:$0xff]
    %v657 = vld [vmem:[#allocation5 + $0x178] sm:$0xff]
    %v658 = vld [vmem:[#allocation5 + $0x180] sm:$0xff]
    %v659 = vld [vmem:[#allocation5 + $0x188] sm:$0xff]
    %v660 = vld [vmem:[#allocation5 + $0x190] sm:$0xff]
    %v661 = vld [vmem:[#allocation5 + $0x198] sm:$0xff]
    %v662 = vld [vmem:[#allocation5 + $0x1a0] sm:$0xff]
    %v663 = vld [vmem:[#allocation5 + $0x1a8] sm:$0xff]
    %v664 = vld [vmem:[#allocation5 + $0x1b0] sm:$0xff]
    %v665 = vld [vmem:[#allocation5 + $0x1b8] sm:$0xff]
    %v666 = vld [vmem:[#allocation5 + $0x1c0] sm:$0xff]
    %v667 = vld [vmem:[#allocation5 + $0x1c8] sm:$0xff]
    %v668 = vld [vmem:[#allocation5 + $0x1d0] sm:$0xff]
    %v669 = vld [vmem:[#allocation5 + $0x1d8] sm:$0xff]
    %v670 = vld [vmem:[#allocation5 + $0x1e0] sm:$0xff]
    %v671 = vld [vmem:[#allocation5 + $0x1e8] sm:$0xff]
    %v672 = vld [vmem:[#allocation5 + $0x1f0] sm:$0xff]
    %v673 = vld [vmem:[#allocation5 + $0x1f8] sm:$0xff]
    %v674 = vsel %vm93, %v643, 0.0
    %675 = vadd.xlane.f32.xlu0 %v674
    %v676 = vpop.xlane.xlu0 %675
    %v677 = vsel %vm93, %v644, 0.0
    %678 = vadd.xlane.f32.xlu0 %v677
    %v679 = vpop.xlane.xlu0 %678
    %v680 = vmul.f32 %v676, %v106
    %v681 = vmul.f32 %v679, %v106
    %v682 = vmul.f32 %v643, %v643
    %v683 = vmul.f32 %v644, %v644
    %v684 = vsel %vm93, %v682, 0.0
    %685 = vadd.xlane.f32.xlu0 %v684
    %v686 = vpop.xlane.xlu0 %685
    %v687 = vsel %vm93, %v683, 0.0
    %688 = vadd.xlane.f32.xlu0 %v687
    %v689 = vpop.xlane.xlu0 %688
    %v690 = vmul.f32 %v686, %v106
    %v691 = vmul.f32 %v689, %v106
    %v692 = vmul.f32 %v680, %v680
    %v693 = vmul.f32 %v681, %v681
    %v694 = vsub.f32 %v690, %v692
    %v695 = vsub.f32 %v691, %v693
    %v696 = vsub.f32 %v643, %v680
    %v697 = vsub.f32 %v644, %v681
    %v698 = vadd.f32 %v694, 1e-05
    %v699 = vadd.f32 %v695, 1e-05
    %v700 = vrsqrt.pop %v698
    %v701 = vmul.f32 %v700, %v698
    %v702 = vmul.f32 %v701, %v700
    %v703 = vmul.f32 0.5, %v702
    %v704 = vsub.f32 1.5, %v703
    %v705 = vmul.f32 %v700, %v704
    %vm706 = vweird.f32 %v698
    %vm707 = vweird.f32 %v700
    %vm708 = vmor %vm706, %vm707
    %v709 = vsel %vm708, %v700, %v705
    %v710 = vrsqrt.pop %v699
    %v711 = vmul.f32 %v710, %v699
    %v712 = vmul.f32 %v711, %v710
    %v713 = vmul.f32 0.5, %v712
    %v714 = vsub.f32 1.5, %v713
    %v715 = vmul.f32 %v710, %v714
    %vm716 = vweird.f32 %v699
    %vm717 = vweird.f32 %v710
    %vm718 = vmor %vm716, %vm717
    %v719 = vsel %vm718, %v710, %v715
    %v720 = vmul.f32 %v696, %v709
    %v721 = vmul.f32 %v697, %v719
    %v722 = vperm.slane %v645, 0
    %v723 = vmul.f32 %v720, %v722
    %v724 = vmul.f32 %v721, %v722
    %v725 = vperm.slane %v646, 0
    %v726 = vadd.f32 %v723, %v725
    %v727 = vadd.f32 %v724, %v725
    %v729 = vsel %vm93, %v726, 0
    %v732 = vsel %vm93, %v727, 0
    %734 = vmatpush.msra.mxu0 0.0
    %735 = vmatpush.msra.mxu0 0.0
    %736 = vmatpush.msra.mxu0 0.0
    %737 = vmatpush.msra.mxu0 0.0
    %738 = vmatpush.msra.mxu0 0.0
    %739 = vmatpush.msra.mxu0 0.0
    %740 = vmatpush.msra.mxu0 0.0
    %741 = vmatpush.msra.mxu0 0.0
    %742 = vmatpush.msra.mxu0 0.0
    %743 = vmatpush.msra.mxu0 0.0
    %744 = vmatpush.msra.mxu0 0.0
    %745 = vmatpush.msra.mxu0 0.0
    %746 = vmatpush.msra.mxu0 %v655
    %747 = vmatpush.msra.mxu0 %v654
    %748 = vmatpush.msra.mxu0 %v653
    %749 = vmatpush.msra.mxu0 %v652
    %750 = vmatmul.f32.gmra.mxu0 %v729
    %v751 = vpop.f32.mrf.mxu0
    %v752 = vadd.f32 0.0, %v751
    %753 = vmatmul.f32.gmra.mxu0 %v732
    %v754 = vpop.f32.mrf.mxu0
    %v755 = vadd.f32 0.0, %v754
    %756 = vdwg.mxu0
    %757 = vmatpush.msra.mxu0 0.0
    %758 = vmatpush.msra.mxu0 0.0
    %759 = vmatpush.msra.mxu0 0.0
    %760 = vmatpush.msra.mxu0 0.0
    %761 = vmatpush.msra.mxu0 0.0
    %762 = vmatpush.msra.mxu0 0.0
    %763 = vmatpush.msra.mxu0 0.0
    %764 = vmatpush.msra.mxu0 0.0
    %765 = vmatpush.msra.mxu0 0.0
    %766 = vmatpush.msra.mxu0 0.0
    %767 = vmatpush.msra.mxu0 0.0
    %768 = vmatpush.msra.mxu0 0.0
    %769 = vmatpush.msra.mxu0 %v659
    %770 = vmatpush.msra.mxu0 %v658
    %771 = vmatpush.msra.mxu0 %v657
    %772 = vmatpush.msra.mxu0 %v656
    %773 = vmatmul.f32.gmra.mxu0 %v729
    %v774 = vpop.f32.mrf.mxu0
    %v775 = vadd.f32 0.0, %v774
    %776 = vmatmul.f32.gmra.mxu0 %v732
    %v777 = vpop.f32.mrf.mxu0
    %v778 = vadd.f32 0.0, %v777
    %779 = vdwg.mxu0
    %v781 = vsel %vm207, %v664, 0
    %v784 = vsel %vm207, %v665, 0
    %786 = vmatpush.msra.mxu0 0.0
    %787 = vmatpush.msra.mxu0 0.0
    %788 = vmatpush.msra.mxu0 0.0
    %789 = vmatpush.msra.mxu0 0.0
    %790 = vmatpush.msra.mxu0 0.0
    %791 = vmatpush.msra.mxu0 0.0
    %792 = vmatpush.msra.mxu0 0.0
    %793 = vmatpush.msra.mxu0 0.0
    %794 = vmatpush.msra.mxu0 0.0
    %795 = vmatpush.msra.mxu0 0.0
    %796 = vmatpush.msra.mxu0 0.0
    %797 = vmatpush.msra.mxu0 0.0
    %798 = vmatpush.msra.mxu0 0.0
    %799 = vmatpush.msra.mxu0 0.0
    %800 = vmatpush.msra.mxu0 %v778
    %801 = vmatpush.msra.mxu0 %v775
    %802 = vmatmul.f32.gmra.mxu0 %v781
    %v803 = vpop.f32.mrf.mxu0
    %v804 = vadd.f32 0.0, %v803
    %805 = vmatmul.f32.gmra.mxu0 %v784
    %v806 = vpop.f32.mrf.mxu0
    %v807 = vadd.f32 0.0, %v806
    %808 = vdwg.mxu0
    %811 = vrot.lane.b32.xlu0 %v804, 8
    %v812 = vpop.permute.xlu0 %811
    %813 = vrot.lane.b32.xlu0 %v807, 8
    %v814 = vpop.permute.xlu0 %813
    %817 = vrot.lane.b32.xlu0 %v804, 16
    %v818 = vpop.permute.xlu0 %817
    %819 = vrot.lane.b32.xlu0 %v807, 16
    %v820 = vpop.permute.xlu0 %819
    %823 = vrot.lane.b32.xlu0 %v804, 24
    %v824 = vpop.permute.xlu0 %823
    %825 = vrot.lane.b32.xlu0 %v807, 24
    %v826 = vpop.permute.xlu0 %825
    %v829 = vsel %vm257, %v804, %v812
    %v830 = vsel %vm257, %v807, %v814
    %v831 = vsel %vm207, %v829, %v818
    %v832 = vsel %vm207, %v830, %v820
    %v833 = vsel %vm262, %v831, %v824
    %v834 = vsel %vm262, %v832, %v826
    %v835 = vmul.f32 %v833, %v46
    %v836 = vmul.f32 %v834, %v47
    %v837 = vmul.f32 %v833, %v48
    %v838 = vmul.f32 %v834, %v49
    %v839 = vmul.f32 %v833, %v50
    %v840 = vmul.f32 %v834, %v51
    %v841 = vmul.f32 %v833, %v52
    %v842 = vmul.f32 %v834, %v53
    %v844 = vsel %vm93, %v752, 0
    %v847 = vsel %vm93, %v755, 0
    %v850 = vsel %vm93, %v835, 0
    %v853 = vsel %vm93, %v836, 0
    %v856 = vsel %vm93, %v837, 0
    %v859 = vsel %vm93, %v838, 0
    %v862 = vsel %vm93, %v839, 0
    %v865 = vsel %vm93, %v840, 0
    %v868 = vsel %vm93, %v841, 0
    %v871 = vsel %vm93, %v842, 0
    %873 = vmatpush.xpose.msra.mxu0 0.0
    %874 = vmatpush.xpose.msra.mxu0 0.0
    %875 = vmatpush.xpose.msra.mxu0 0.0
    %876 = vmatpush.xpose.msra.mxu0 0.0
    %877 = vmatpush.xpose.msra.mxu0 0.0
    %878 = vmatpush.xpose.msra.mxu0 0.0
    %879 = vmatpush.xpose.msra.mxu0 0.0
    %880 = vmatpush.xpose.msra.mxu0 0.0
    %881 = vmatpush.xpose.msra.mxu0 %v871
    %882 = vmatpush.xpose.msra.mxu0 %v868
    %883 = vmatpush.xpose.msra.mxu0 %v865
    %884 = vmatpush.xpose.msra.mxu0 %v862
    %885 = vmatpush.xpose.msra.mxu0 %v859
    %886 = vmatpush.xpose.msra.mxu0 %v856
    %887 = vmatpush.xpose.msra.mxu0 %v853
    %888 = vmatpush.xpose.msra.mxu0 %v850
    %889 = vmatmul.f32.gmra.mxu0 %v844
    %v890 = vpop.f32.mrf.mxu0
    %v891 = vadd.f32 %v54, %v890
    %892 = vmatmul.f32.gmra.mxu0 %v847
    %v893 = vpop.f32.mrf.mxu0
    %v894 = vadd.f32 %v55, %v893
    %895 = vdwg.mxu0
    %v896 = vmul.f32 %v891, 1.442695
    %v897 = vpow.pop %v896
    %v898 = vmul.f32 %v894, 1.442695
    %v899 = vpow.pop %v898
    %v901 = vsel %vm330, %v897, 0
    %v904 = vsel %vm330, %v899, 0
    %906 = vmatpush.msra.mxu0 0.0
    %907 = vmatpush.msra.mxu0 0.0
    %908 = vmatpush.msra.mxu0 0.0
    %909 = vmatpush.msra.mxu0 0.0
    %910 = vmatpush.msra.mxu0 0.0
    %911 = vmatpush.msra.mxu0 0.0
    %912 = vmatpush.msra.mxu0 0.0
    %913 = vmatpush.msra.mxu0 0.0
    %914 = vmatpush.msra.mxu0 %v63
    %915 = vmatpush.msra.mxu0 %v62
    %916 = vmatpush.msra.mxu0 %v61
    %917 = vmatpush.msra.mxu0 %v60
    %918 = vmatpush.msra.mxu0 %v59
    %919 = vmatpush.msra.mxu0 %v58
    %920 = vmatpush.msra.mxu0 %v57
    %921 = vmatpush.msra.mxu0 %v56
    %922 = vmatmul.f32.gmra.mxu0 %v901
    %v923 = vpop.f32.mrf.mxu0
    %v924 = vadd.f32 0.0, %v923
    %925 = vmatmul.f32.gmra.mxu0 %v904
    %v926 = vpop.f32.mrf.mxu0
    %v927 = vadd.f32 0.0, %v926
    %928 = vdwg.mxu0
    %v929 = vrcp.pop %v924
    %v930 = vmul.f32 %v924, %v929
    %v931 = vsub.f32 1.0, %v930
    %v932 = vmul.f32 %v929, %v931
    %v933 = vadd.f32 %v929, %v932
    %vm934 = vweird.f32 %v924
    %vm935 = vweird.f32 %v929
    %vm936 = vmor %vm934, %vm935
    %v937 = vsel %vm936, %v929, %v933
    %v938 = vand.u32 2147483647, %v924
    %vm939 = vcmp.eq.f32.partialorder %v938, 8.507059e+37
    %v940 = vand.u32 %v924, 2147483648
    %v941 = vor.u32 1.1754944e-38, %v940
    %v942 = vsel %vm939, %v941, %v937
    %v943 = vmul.f32 %v897, %v942
    %v944 = vrcp.pop %v927
    %v945 = vmul.f32 %v927, %v944
    %v946 = vsub.f32 1.0, %v945
    %v947 = vmul.f32 %v944, %v946
    %v948 = vadd.f32 %v944, %v947
    %vm949 = vweird.f32 %v927
    %vm950 = vweird.f32 %v944
    %vm951 = vmor %vm949, %vm950
    %v952 = vsel %vm951, %v944, %v948
    %v953 = vand.u32 2147483647, %v927
    %vm954 = vcmp.eq.f32.partialorder %v953, 8.507059e+37
    %v955 = vand.u32 %v927, 2147483648
    %v956 = vor.u32 1.1754944e-38, %v955
    %v957 = vsel %vm954, %v956, %v952
    %v958 = vmul.f32 %v899, %v957
    %v960 = vsel %vm330, %v943, 0
    %v963 = vsel %vm330, %v958, 0
    %965 = vmatpush.msra.mxu0 0.0
    %966 = vmatpush.msra.mxu0 0.0
    %967 = vmatpush.msra.mxu0 0.0
    %968 = vmatpush.msra.mxu0 0.0
    %969 = vmatpush.msra.mxu0 0.0
    %970 = vmatpush.msra.mxu0 0.0
    %971 = vmatpush.msra.mxu0 0.0
    %972 = vmatpush.msra.mxu0 0.0
    %973 = vmatpush.msra.mxu0 %v842
    %974 = vmatpush.msra.mxu0 %v841
    %975 = vmatpush.msra.mxu0 %v840
    %976 = vmatpush.msra.mxu0 %v839
    %977 = vmatpush.msra.mxu0 %v838
    %978 = vmatpush.msra.mxu0 %v837
    %979 = vmatpush.msra.mxu0 %v836
    %980 = vmatpush.msra.mxu0 %v835
    %981 = vmatmul.f32.gmra.mxu0 %v960
    %v982 = vpop.f32.mrf.mxu0
    %v983 = vadd.f32 0.0, %v982
    %984 = vmatmul.f32.gmra.mxu0 %v963
    %v985 = vpop.f32.mrf.mxu0
    %v986 = vadd.f32 0.0, %v985
    %987 = vdwg.mxu0
    %v989 = vsel %vm93, %v983, 0
    %v992 = vsel %vm93, %v986, 0
    %994 = vmatpush.msra.mxu0 0.0
    %995 = vmatpush.msra.mxu0 0.0
    %996 = vmatpush.msra.mxu0 0.0
    %997 = vmatpush.msra.mxu0 0.0
    %998 = vmatpush.msra.mxu0 0.0
    %999 = vmatpush.msra.mxu0 0.0
    %1000 = vmatpush.msra.mxu0 0.0
    %1001 = vmatpush.msra.mxu0 0.0
    %1002 = vmatpush.msra.mxu0 0.0
    %1003 = vmatpush.msra.mxu0 0.0
    %1004 = vmatpush.msra.mxu0 0.0
    %1005 = vmatpush.msra.mxu0 0.0
    %1006 = vmatpush.msra.mxu0 %v663
    %1007 = vmatpush.msra.mxu0 %v662
    %1008 = vmatpush.msra.mxu0 %v661
    %1009 = vmatpush.msra.mxu0 %v660
    %1010 = vmatmul.f32.gmra.mxu0 %v989
    %v1011 = vpop.f32.mrf.mxu0
    %v1012 = vadd.f32 0.0, %v1011
    %1013 = vmatmul.f32.gmra.mxu0 %v992
    %v1014 = vpop.f32.mrf.mxu0
    %v1015 = vadd.f32 0.0, %v1014
    %1016 = vdwg.mxu0
    %v1017 = vadd.f32 %v643, %v1012
    %v1018 = vadd.f32 %v644, %v1015
    %v1019 = vperm.slane %v649, 0
    %v1020 = vadd.f32 %v1017, %v1019
    %v1021 = vadd.f32 %v1018, %v1019
    %v1022 = vsel %vm93, %v1020, 0.0
    %1023 = vadd.xlane.f32.xlu0 %v1022
    %v1024 = vpop.xlane.xlu0 %1023
    %v1025 = vsel %vm93, %v1021, 0.0
    %1026 = vadd.xlane.f32.xlu0 %v1025
    %v1027 = vpop.xlane.xlu0 %1026
    %v1028 = vmul.f32 %v1024, %v106
    %v1029 = vmul.f32 %v1027, %v106
    %v1030 = vmul.f32 %v1020, %v1020
    %v1031 = vmul.f32 %v1021, %v1021
    %v1032 = vsel %vm93, %v1030, 0.0
    %1033 = vadd.xlane.f32.xlu0 %v1032
    %v1034 = vpop.xlane.xlu0 %1033
    %v1035 = vsel %vm93, %v1031, 0.0
    %1036 = vadd.xlane.f32.xlu0 %v1035
    %v1037 = vpop.xlane.xlu0 %1036
    %v1038 = vmul.f32 %v1034, %v106
    %v1039 = vmul.f32 %v1037, %v106
    %v1040 = vmul.f32 %v1028, %v1028
    %v1041 = vmul.f32 %v1029, %v1029
    %v1042 = vsub.f32 %v1038, %v1040
    %v1043 = vsub.f32 %v1039, %v1041
    %v1044 = vsub.f32 %v1020, %v1028
    %v1045 = vsub.f32 %v1021, %v1029
    %v1046 = vadd.f32 %v1042, 1e-05
    %v1047 = vadd.f32 %v1043, 1e-05
    %v1048 = vrsqrt.pop %v1046
    %v1049 = vmul.f32 %v1048, %v1046
    %v1050 = vmul.f32 %v1049, %v1048
    %v1051 = vmul.f32 0.5, %v1050
    %v1052 = vsub.f32 1.5, %v1051
    %v1053 = vmul.f32 %v1048, %v1052
    %vm1054 = vweird.f32 %v1046
    %vm1055 = vweird.f32 %v1048
    %vm1056 = vmor %vm1054, %vm1055
    %v1057 = vsel %vm1056, %v1048, %v1053
    %v1058 = vrsqrt.pop %v1047
    %v1059 = vmul.f32 %v1058, %v1047
    %v1060 = vmul.f32 %v1059, %v1058
    %v1061 = vmul.f32 0.5, %v1060
    %v1062 = vsub.f32 1.5, %v1061
    %v1063 = vmul.f32 %v1058, %v1062
    %vm1064 = vweird.f32 %v1047
    %vm1065 = vweird.f32 %v1058
    %vm1066 = vmor %vm1064, %vm1065
    %v1067 = vsel %vm1066, %v1058, %v1063
    %v1068 = vmul.f32 %v1044, %v1057
    %v1069 = vmul.f32 %v1045, %v1067
    %v1070 = vperm.slane %v647, 0
    %v1071 = vmul.f32 %v1068, %v1070
    %v1072 = vmul.f32 %v1069, %v1070
    %v1073 = vperm.slane %v648, 0
    %v1074 = vadd.f32 %v1071, %v1073
    %v1075 = vadd.f32 %v1072, %v1073
    %v1076 = vperm.slane %v651, 0
    %v1078 = vsel %vm93, %v1074, 0
    %v1081 = vsel %vm93, %v1075, 0
    %1083 = vmatpush.msra.mxu0 0.0
    %1084 = vmatpush.msra.mxu0 0.0
    %1085 = vmatpush.msra.mxu0 0.0
    %1086 = vmatpush.msra.mxu0 0.0
    %1087 = vmatpush.msra.mxu0 0.0
    %1088 = vmatpush.msra.mxu0 0.0
    %1089 = vmatpush.msra.mxu0 0.0
    %1090 = vmatpush.msra.mxu0 0.0
    %1091 = vmatpush.msra.mxu0 0.0
    %1092 = vmatpush.msra.mxu0 0.0
    %1093 = vmatpush.msra.mxu0 0.0
    %1094 = vmatpush.msra.mxu0 0.0
    %1095 = vmatpush.msra.mxu0 %v669
    %1096 = vmatpush.msra.mxu0 %v668
    %1097 = vmatpush.msra.mxu0 %v667
    %1098 = vmatpush.msra.mxu0 %v666
    %1099 = vmatmul.f32.gmra.mxu0 %v1078
    %v1100 = vpop.f32.mrf.mxu0
    %v1101 = vadd.f32 %v1076, %v1100
    %1102 = vmatmul.f32.gmra.mxu0 %v1081
    %v1103 = vpop.f32.mrf.mxu0
    %v1104 = vadd.f32 %v1076, %v1103
    %1105 = vdwg.mxu0
    %v1106 = vmul.f32 %v1101, 0.5
    %v1107 = vmul.f32 %v1104, 0.5
    %v1108 = vmul.f32 %v1101, 0.70710677
    %v1109 = vmul.f32 %v1104, 0.70710677
    %v1110 = vand.u32 2147483647, %v1108
    %v1111 = vand.u32 2147483647, %v1109
    %v1112 = vmul.f32 %v1110, 0.3275911
    %v1113 = vmul.f32 %v1111, 0.3275911
    %v1114 = vadd.f32 %v1112, 1.0
    %v1115 = vadd.f32 %v1113, 1.0
    %v1116 = vrcp.pop %v1114
    %v1117 = vmul.f32 %v1114, %v1116
    %v1118 = vsub.f32 1.0, %v1117
    %v1119 = vmul.f32 %v1116, %v1118
    %v1120 = vadd.f32 %v1116, %v1119
    %vm1121 = vweird.f32 %v1114
    %vm1122 = vweird.f32 %v1116
    %vm1123 = vmor %vm1121, %vm1122
    %v1124 = vsel %vm1123, %v1116, %v1120
    %v1125 = vand.u32 2147483647, %v1114
    %vm1126 = vcmp.eq.f32.partialorder %v1125, 8.507059e+37
    %v1127 = vand.u32 %v1114, 2147483648
    %v1128 = vor.u32 1.1754944e-38, %v1127
    %v1129 = vsel %vm1126, %v1128, %v1124
    %v1130 = vmul.f32 1.0, %v1129
    %v1131 = vrcp.pop %v1115
    %v1132 = vmul.f32 %v1115, %v1131
    %v1133 = vsub.f32 1.0, %v1132
    %v1134 = vmul.f32 %v1131, %v1133
    %v1135 = vadd.f32 %v1131, %v1134
    %vm1136 = vweird.f32 %v1115
    %vm1137 = vweird.f32 %v1131
    %vm1138 = vmor %vm1136, %vm1137
    %v1139 = vsel %vm1138, %v1131, %v1135
    %v1140 = vand.u32 2147483647, %v1115
    %vm1141 = vcmp.eq.f32.partialorder %v1140, 8.507059e+37
    %v1142 = vand.u32 %v1115, 2147483648
    %v1143 = vor.u32 1.1754944e-38, %v1142
    %v1144 = vsel %vm1141, %v1143, %v1139
    %v1145 = vmul.f32 1.0, %v1144
    %v1146 = vmul.f32 %v1130, 1.0614054
    %v1147 = vmul.f32 %v1145, 1.0614054
    %v1148 = vadd.f32 %v1146, -1.4531521
    %v1149 = vadd.f32 %v1147, -1.4531521
    %v1150 = vmul.f32 %v1148, %v1130
    %v1151 = vmul.f32 %v1149, %v1145
    %v1152 = vadd.f32 %v1150, 1.4214138
    %v1153 = vadd.f32 %v1151, 1.4214138
    %v1154 = vmul.f32 %v1152, %v1130
    %v1155 = vmul.f32 %v1153, %v1145
    %v1156 = vadd.f32 %v1154, -0.28449672
    %v1157 = vadd.f32 %v1155, -0.28449672
    %v1158 = vmul.f32 %v1156, %v1130
    %v1159 = vmul.f32 %v1157, %v1145
    %v1160 = vadd.f32 %v1158, 0.2548296
    %v1161 = vadd.f32 %v1159, 0.2548296
    %v1162 = vmul.f32 %v1160, %v1130
    %v1163 = vmul.f32 %v1161, %v1145
    %v1164 = vsub.f32 0.0, %v1110
    %v1165 = vsub.f32 0.0, %v1111
    %v1166 = vmul.f32 %v1164, %v1110
    %v1167 = vmul.f32 %v1165, %v1111
    %v1168 = vmul.f32 %v1166, 1.442695
    %v1169 = vpow.pop %v1168
    %v1170 = vmul.f32 %v1167, 1.442695
    %v1171 = vpow.pop %v1170
    %v1172 = vmul.f32 %v1162, %v1169
    %v1173 = vmul.f32 %v1163, %v1171
    %v1174 = vsub.f32 1.0, %v1172
    %v1175 = vsub.f32 1.0, %v1173
    %vm1176 = vcmp.ge.f32.partialorder %v1108, 0.0
    %vm1177 = vcmp.ge.f32.partialorder %v1109, 0.0
    %v1178 = vsub.f32 0.0, %v1174
    %v1179 = vsub.f32 0.0, %v1175
    %v1180 = vsel %vm1176, %v1174, %v1178
    %v1181 = vsel %vm1177, %v1175, %v1179
    %v1182 = vadd.f32 %v1180, 1.0
    %v1183 = vadd.f32 %v1181, 1.0
    %v1184 = vmul.f32 %v1106, %v1182
    %v1185 = vmul.f32 %v1107, %v1183
    %1186 = vmatpush.xpose.msra.mxu0 0.0
    %1187 = vmatpush.xpose.msra.mxu0 0.0
    %1188 = vmatpush.xpose.msra.mxu0 0.0
    %1189 = vmatpush.xpose.msra.mxu0 0.0
    %1190 = vmatpush.xpose.msra.mxu0 0.0
    %1191 = vmatpush.xpose.msra.mxu0 0.0
    %1192 = vmatpush.xpose.msra.mxu0 0.0
    %1193 = vmatpush.xpose.msra.mxu0 0.0
    %1194 = vmatpush.xpose.msra.mxu0 0.0
    %1195 = vmatpush.xpose.msra.mxu0 0.0
    %1196 = vmatpush.xpose.msra.mxu0 0.0
    %1197 = vmatpush.xpose.msra.mxu0 0.0
    %1198 = vmatpush.xpose.msra.mxu0 %v673
    %1199 = vmatpush.xpose.msra.mxu0 %v672
    %1200 = vmatpush.xpose.msra.mxu0 %v671
    %1201 = vmatpush.xpose.msra.mxu0 %v670
    %1202 = vmatmul.f32.gmra.mxu0 %v1184
    %v1203 = vpop.f32.mrf.mxu0
    %v1204 = vadd.f32 0.0, %v1203
    %1205 = vmatmul.f32.gmra.mxu0 %v1185
    %v1206 = vpop.f32.mrf.mxu0
    %v1207 = vadd.f32 0.0, %v1206
    %1208 = vdwg.mxu0
    %v1209 = vadd.f32 %v1020, %v1204
    %v1210 = vadd.f32 %v1021, %v1207
    %v1211 = vperm.slane %v650, 0
    %v1212 = vadd.f32 %v1209, %v1211
    %v1213 = vadd.f32 %v1210, %v1211
    %1214 = vst.msk [vmem:[#allocation7] sm:$0xff] %vm93, %v1212
    %1215 = vst.msk [vmem:[#allocation7 + $0x8] sm:$0xff] %vm93, %v1213
    // Predicated region
    $region18: #{efficient_transformer.1} parent=1 // pred_check
      _
    $region19: #{efficient_transformer.1} parent=1 // pred_check_branch
      %1217 = sbr.rel (0) target = $region21
    $region20: #{efficient_transformer.1} parent=1 // pred_region
      %1219 = vsyncadd [#allocation4], 0
      %s1220 = sshll.u32 [#allocation7], 4
      %s1221 = int_to_ptr.vmem [resolvable:$true] %s1220
      %s1222 = sshll.u32 %s2, 4
      %s1223 = int_to_ptr.hbm [resolvable:$true] %s1222
      %1228 = dma.vmem_to_hbm [thread:$0]  %s1221, 256, %s1223, [#allocation4], 128, 128, 8
    $region21: #{efficient_transformer.1} parent=1 // pred_fallthru
      _
    // Predicated region
    $region22: #{efficient_transformer.1} parent=1 // pred_check
      _
    $region23: #{efficient_transformer.1} parent=1 // pred_check_branch
      %1230 = sbr.rel (0) target = $region25
    $region24: #{efficient_transformer.1} parent=1 // pred_region
      %1232 = dma.done [#allocation4], 256
    $region25: #{efficient_transformer.1} parent=1 // pred_fallthru
      _
    %1233 = vsyncpa [#allocation3], 1
    %1234 = vsyncpa [#allocation6], 1
    %1235 = vsyncpa [#allocation4], 1

</llo_original>
